<compile_context>
chip_gen: v7x
topology: tpu7x:2x2x1
jax: 0.10.0
libtpu: 0.0.40
codegen_flags: <defaults>
</compile_context>

<pallas_src>
import jax
import jax.numpy as jnp
import numpy as np
from jax import lax
from jax.experimental import pallas as pl
from jax.experimental.pallas import tpu as pltpu


# ----------------------- wrapper-side algebraic folds ---------------------- #

def _phase_fold_3x3(w9):
    """Fold nearest-2x upsample into a depthwise 3x3 kernel.

    Returns (16, C): for each of the 4 output spatial phases (pa, pb), a 2x2
    kernel applied to the un-upsampled, 1-px zero-padded input (tap order
    (row, col) in {0,1}^2).  Exact, including image borders, because
    floor((r)/2) maps the 1-px upsampled halo onto the 1-px low-res halo.
    """
    c = w9.shape[1]
    w = w9.reshape(3, 3, c)
    groups = {0: ((0,), (1, 2)), 1: ((0, 1), (2,))}
    taps = []
    for pa in (0, 1):
        for pb in (0, 1):
            for rset in groups[pa]:
                for cset in groups[pb]:
                    acc = jnp.zeros((c,), jnp.float32)
                    for kh in rset:
                        for kw in cset:
                            acc = acc + w[kh, kw]
                    taps.append(acc)
    return jnp.stack(taps, axis=0)                      # (16, C)


# ----------------------------- Pallas kernel ------------------------------- #

def _make_upblock_kernel(Hs, Ws, C, Cout, TS, TH):
    """Fused DHFE_UpBlock2d kernel for one batch element (NHWC)."""
    Ho, Wo = 2 * Hs, 2 * Ws
    Hp, Wp = Ho + 2, Wo + 2
    Hsp, Wsp = Hs + 2, Ws + 2

    def kernel(x_ref, w1a_ref, w1b_ref, w2a_ref, w2b_ref,
               bnsh_ref, wp_ref, bp_ref, out_ref,
               xpad_ref, ya_ref, yb_ref):
        f32 = jnp.float32

        # ---- zero only the 1-px halo rings of the padded scratches ----------
        # (interiors are fully rewritten every grid step; rings are re-zeroed
        #  per step so the kernel stays correct when the batch axis is split
        #  across TensorCores -- scratch is per-core and not zero-initialized.)
        xpad_ref[0:1, :, :] = jnp.zeros((1, Wsp, C), f32)
        xpad_ref[Hsp - 1:Hsp, :, :] = jnp.zeros((1, Wsp, C), f32)
        xpad_ref[:, 0:1, :] = jnp.zeros((Hsp, 1, C), f32)
        xpad_ref[:, Wsp - 1:Wsp, :] = jnp.zeros((Hsp, 1, C), f32)
        for r in (ya_ref, yb_ref):
            r[0:1, :, :] = jnp.zeros((1, Wp, C), f32)
            r[Hp - 1:Hp, :, :] = jnp.zeros((1, Wp, C), f32)
            r[:, 0:1, :] = jnp.zeros((Hp, 1, C), f32)
            r[:, Wp - 1:Wp, :] = jnp.zeros((Hp, 1, C), f32)

        # ---- pre-upsample input into its (small, Hs+2 x Ws+2) padded scratch
        xpad_ref[1:Hs + 1, 1:Ws + 1, :] = x_ref[0]

        w1a = w1a_ref[...]          # (16, C): 4 spatial phases x 4 taps each
        w1b = w1b_ref[...]
        w2a = w2a_ref[...]          # (9, C): BatchNorm scale already folded in
        w2b = w2b_ref[...]

        # ---- stage 1: upsample + depthwise conv1 as 4 phase-wise 2x2 convs ---
        n1 = Hs // TS

        def conv1_strip(s, carry):
            i0 = s * TS
            xs = xpad_ref[pl.ds(i0, TS + 2)]            # (TS+2, Ws+2, C)
            # three 1-px column windows of the small strip (loaded once)
            xw = [xs[:, c0:c0 + Ws, :] for c0 in range(3)]

            def branch(wph, dst_ref):
                rows = []
                for pa in range(2):
                    cols = []
                    for pb in range(2):
                        p = 2 * pa + pb
                        acc = None
                        for ri in range(2):
                            for ci in range(2):
                                q = 4 * p + 2 * ri + ci
                                t = (xw[pb + ci][pa + ri:pa + ri + TS]
                                     * wph[q:q + 1, :].reshape(1, 1, C))
                                acc = t if acc is None else acc + t
                        cols.append(acc)                # (TS, Ws, C)
                    # interleave the two column phases -> (TS, Wo, C)
                    rows.append(jnp.stack(cols, axis=2).reshape(TS, Wo, C))
                # interleave the two row phases -> (TH, Wo, C)
                blk = jnp.stack(rows, axis=1).reshape(TH, Wo, C)
                dst_ref[pl.ds(1 + 2 * i0, TH), 1:Wo + 1, :] = blk

            branch(w1a, ya_ref)                         # conv1 out chans 2c
            branch(w1b, yb_ref)                         # conv1 out chans 2c+1
            return carry

        lax.fori_loop(0, n1, conv1_strip, 0)

        # ---- stage 2: grouped 3x3 (scale folded) + shift + ReLU + 1x1 + sig --
        bn_shift = bnsh_ref[...].reshape(1, 1, C)
        wp = wp_ref[...]
        bp = bp_ref[...]
        n2 = Ho // TH

        def out_strip(s, carry):
            r0 = s * TH
            acc = None
            # process the two conv1 branches sequentially to cap live vregs
            for yref, w2 in ((ya_ref, w2a), (yb_ref, w2b)):
                for kh in range(3):
                    rows = yref[pl.ds(r0 + kh, TH)]     # (TH, Wp, C), loaded once
                    for kw in range(3):
                        k = 3 * kh + kw
                        t = rows[:, kw:kw + Wo, :] * w2[k:k + 1, :].reshape(1, 1, C)
                        acc = t if acc is None else acc + t
            z = jnp.maximum(acc + bn_shift, 0.0)
            # channel_shuffle(x, groups=Cin) with 1 channel per group: identity.
            zm = z.reshape(TH * Wo, C)
            o = jnp.dot(zm, wp, preferred_element_type=jnp.float32) + bp
            o = jax.nn.sigmoid(o)
            out_ref[0, pl.ds(r0, TH)] = o.reshape(TH, Wo, Cout).astype(out_ref.dtype)
            return carry

        lax.fori_loop(0, n2, out_strip, 0)

    return kernel


def dhfe_upblock(x, p):
    """One DHFE_UpBlock2d.  Input/output NHWC; everything fused in one kernel."""
    N, Hs, Ws, Cin = x.shape
    Ho, Wo = 2 * Hs, 2 * Ws
    Cout = p["wp"].shape[1]

    # Output-row strip size: keeps per-strip accumulators / windows small.
    TH = 4 if Ho % 4 == 0 else 2
    TS = TH // 2

    # Algebraic pre-folds (done once in the wrapper, outside the kernel):
    #  * inference-BatchNorm scale folded into the grouped-conv weights (exact)
    #  * nearest-2x upsample folded into conv1 as 4 phase-wise 2x2 kernels.
    w2a = p["w2a"] * p["bn_scale"]
    w2b = p["w2b"] * p["bn_scale"]
    w1a_ph = _phase_fold_3x3(p["w1a"])
    w1b_ph = _phase_fold_3x3(p["w1b"])

    kernel = _make_upblock_kernel(Hs, Ws, Cin, Cout, TS, TH)

    flops = N * Ho * Wo * Cin * (16 + 36 + 2 + 2 * Cout)
    transcendentals = N * Ho * Wo * Cout
    bytes_accessed = 4 * (N * Hs * Ws * Cin + N * Ho * Wo * Cout
                          + (2 * 16 + 2 * 9 + 1) * Cin + Cin * Cout + Cout)

    # TODO(synk): for production spatial sizes add a row-tile grid axis (with a
    # 1-row pre-upsample halo) so v7x's 2 TensorCores get >1 step each and
    # blocks stay under its 64 MiB VMEM; also consider a lane-dense
    # (N, Ho, Wo*Cout) out_spec and bf16 elementwise math on v6e/v7x (kept f32
    # here for v5e portability and tight tolerance).
    out = pl.pallas_call(
        kernel,
        out_shape=jax.ShapeDtypeStruct((N, Ho, Wo, Cout), jnp.float32),
        grid=(N,),
        in_specs=[
            pl.BlockSpec((1, Hs, Ws, Cin), lambda n: (n, 0, 0, 0)),
            pl.BlockSpec((16, Cin), lambda n: (0, 0)),
            pl.BlockSpec((16, Cin), lambda n: (0, 0)),
            pl.BlockSpec((9, Cin), lambda n: (0, 0)),
            pl.BlockSpec((9, Cin), lambda n: (0, 0)),
            pl.BlockSpec((1, Cin), lambda n: (0, 0)),
            pl.BlockSpec((Cin, Cout), lambda n: (0, 0)),
            pl.BlockSpec((1, Cout), lambda n: (0, 0)),
        ],
        out_specs=pl.BlockSpec((1, Ho, Wo, Cout), lambda n: (n, 0, 0, 0)),
        scratch_shapes=[pltpu.VMEM((Hs + 2, Ws + 2, Cin), jnp.float32),
                        pltpu.VMEM((Ho + 2, Wo + 2, Cin), jnp.float32),
                        pltpu.VMEM((Ho + 2, Wo + 2, Cin), jnp.float32)],
        compiler_params=pltpu.CompilerParams(
            dimension_semantics=("parallel",),
            vmem_limit_bytes=32 * 1024 * 1024),
        cost_estimate=pl.CostEstimate(flops=flops,
                                      transcendentals=transcendentals,
                                      bytes_accessed=bytes_accessed),
    )(x, w1a_ph, w1b_ph, w2a, w2b, p["bn_shift"], p["wp"], p["bp"])
    return out


def decoder_forward(x_list, params_list):
    """Decoder.forward: NCHW at the boundary, NHWC internally (one transpose
    per feature map at entry, one at exit); skips concatenated on channels."""
    feats = [jnp.transpose(t, (0, 2, 3, 1)).astype(jnp.float32) for t in x_list]
    out = feats.pop()
    for p in params_list:
        out = dhfe_upblock(out, p)
        skip = feats.pop()
        out = jnp.concatenate([out, skip], axis=-1)
    return jnp.transpose(out, (0, 3, 1, 2))                      # -> NCHW


# --------------------------- parameter init -------------------------------- #

def init_dhfe_params(key, c_in, c_out):
    ks = jax.random.split(key, 8)
    s = 0.2
    w1a = s * jax.random.normal(ks[0], (9, c_in), jnp.float32)   # conv1 out chan 2c
    w1b = s * jax.random.normal(ks[1], (9, c_in), jnp.float32)   # conv1 out chan 2c+1
    w2a = s * jax.random.normal(ks[2], (9, c_in), jnp.float32)   # conv2 tap on chan 2g
    w2b = s * jax.random.normal(ks[3], (9, c_in), jnp.float32)   # conv2 tap on chan 2g+1
    gamma = 1.0 + 0.1 * jax.random.normal(ks[4], (1, c_in), jnp.float32)
    beta = 0.1 * jax.random.normal(ks[5], (1, c_in), jnp.float32)
    eps = 1e-5
    # Inference-mode BatchNorm with default running stats (mean=0, var=1), folded.
    # TODO(synk): training-mode BatchNorm (per-batch statistics) not implemented.
    bn_scale = gamma / jnp.sqrt(1.0 + eps)
    bn_shift = beta
    wp = s * jax.random.normal(ks[6], (c_in, c_out), jnp.float32)
    bp = s * jax.random.normal(ks[7], (1, c_out), jnp.float32)
    return dict(w1a=w1a, w1b=w1b, w2a=w2a, w2b=w2b,
                bn_scale=bn_scale, bn_shift=bn_shift, wp=wp, bp=bp)


# -------------------------- pure-JAX reference ----------------------------- #

def _ref_upblock(x, p):
    c_in = p["w1a"].shape[1]
    c_out = p["wp"].shape[1]
    x = jnp.repeat(jnp.repeat(x, 2, axis=2), 2, axis=3)
    w1a = p["w1a"].T.reshape(c_in, 3, 3)
    w1b = p["w1b"].T.reshape(c_in, 3, 3)
    W1 = jnp.stack([w1a, w1b], axis=1).reshape(2 * c_in, 1, 3, 3)
    y = lax.conv_general_dilated(x, W1, (1, 1), "SAME",
                                 dimension_numbers=("NCHW", "OIHW", "NCHW"),
                                 feature_group_count=c_in,
                                 precision=lax.Precision.HIGHEST)
    w2a = p["w2a"].T.reshape(c_in, 3, 3)
    w2b = p["w2b"].T.reshape(c_in, 3, 3)
    W2 = jnp.stack([w2a, w2b], axis=1)  # (c_in, 2, 3, 3)
    y = lax.conv_general_dilated(y, W2, (1, 1), "SAME",
                                 dimension_numbers=("NCHW", "OIHW", "NCHW"),
                                 feature_group_count=c_in,
                                 precision=lax.Precision.HIGHEST)
    y = y * p["bn_scale"].reshape(1, c_in, 1, 1) + p["bn_shift"].reshape(1, c_in, 1, 1)
    y = jnp.maximum(y, 0.0)
    o = jnp.einsum("nchw,cd->ndhw", y, p["wp"], precision=lax.Precision.HIGHEST)
    o = o + p["bp"].reshape(1, c_out, 1, 1)
    return jax.nn.sigmoid(o)


def ref_decoder(x_list, params_list):
    feats = list(x_list)
    out = feats.pop()
    for p in params_list:
        out = _ref_upblock(out, p)
        out = jnp.concatenate([out, feats.pop()], axis=1)
    return out


# --------------------------------- main ------------------------------------ #

if __name__ == "__main__":
    key = jax.random.PRNGKey(0)
    block_expansion, in_features, num_blocks, max_features = 8, 4, 3, 256
    N, H0, W0 = 2, 4, 4

    # Hourglass-encoder-style feature pyramid the decoder consumes (NCHW).
    chans = [in_features] + [min(max_features, block_expansion * 2 ** (i + 1))
                             for i in range(num_blocks)]           # [4, 16, 32, 64]
    keys = jax.random.split(key, len(chans) + num_blocks)
    x_list = []
    for idx, c in enumerate(chans):
        h = H0 * (2 ** (num_blocks - idx))
        w = W0 * (2 ** (num_blocks - idx))
        x_list.append(jax.random.normal(keys[idx], (N, c, h, w), jnp.float32))

    # Up-block channel config mirrors Decoder.__init__.
    params_list = []
    pk = keys[len(chans):]
    for j, i in enumerate(range(num_blocks)[::-1]):
        in_f = (1 if i == num_blocks - 1 else 2) * min(max_features,
                                                       block_expansion * 2 ** (i + 1))
        out_f = min(max_features, block_expansion * 2 ** i)
        params_list.append(init_dhfe_params(pk[j], in_f, out_f))

    out = decoder_forward(x_list, params_list)
    out = jax.block_until_ready(out)

    expected_shape = (N, block_expansion + in_features,
                      H0 * 2 ** num_blocks, W0 * 2 ** num_blocks)
    assert out.shape == expected_shape, (out.shape, expected_shape)

    ref = jax.block_until_ready(ref_decoder(x_list, params_list))
    # Pointwise 1x1 conv runs at default MXU precision (bf16 passes) inside the
    # kernel while the reference uses HIGHEST; sigmoid-bounded outputs stay
    # well within 5e-3.
    np.testing.assert_allclose(np.asarray(out), np.asarray(ref), rtol=5e-3, atol=5e-3)

    print("KERNEL_OK")
</pallas_src>

<mosaic_0001>
module attributes {stable_mosaic.version = 11 : i64} {
  func.func @kernel(%arg0: i32, %arg1: memref<1x4x4x64xf32, #tpu.memory_space<vmem>>, %arg2: memref<16x64xf32, #tpu.memory_space<vmem>>, %arg3: memref<16x64xf32, #tpu.memory_space<vmem>>, %arg4: memref<9x64xf32, #tpu.memory_space<vmem>>, %arg5: memref<9x64xf32, #tpu.memory_space<vmem>>, %arg6: memref<1x64xf32, #tpu.memory_space<vmem>>, %arg7: memref<64x32xf32, #tpu.memory_space<vmem>>, %arg8: memref<1x32xf32, #tpu.memory_space<vmem>>, %arg9: memref<1x8x8x32xf32, #tpu.memory_space<vmem>>, %arg10: memref<6x6x64xf32, #tpu.memory_space<vmem>>, %arg11: memref<10x10x64xf32, #tpu.memory_space<vmem>>, %arg12: memref<10x10x64xf32, #tpu.memory_space<vmem>>) attributes {dimension_semantics = [#tpu.dimension_semantics<parallel>], iteration_bounds = array<i64: 2>, scalar_prefetch = 0 : i64, scratch_operands = 3 : i64, tpu.core_type = #tpu.core_type<tc>, window_params = [{transform_indices = @transform_0, window_bounds = array<i64: 1, 4, 4, 64>}, {pipeline_mode = #tpu.pipeline_mode<synchronous>, transform_indices = @transform_1, window_bounds = array<i64: 16, 64>}, {pipeline_mode = #tpu.pipeline_mode<synchronous>, transform_indices = @transform_2, window_bounds = array<i64: 16, 64>}, {pipeline_mode = #tpu.pipeline_mode<synchronous>, transform_indices = @transform_3, window_bounds = array<i64: 9, 64>}, {pipeline_mode = #tpu.pipeline_mode<synchronous>, transform_indices = @transform_4, window_bounds = array<i64: 9, 64>}, {pipeline_mode = #tpu.pipeline_mode<synchronous>, transform_indices = @transform_5, window_bounds = array<i64: 1, 64>}, {pipeline_mode = #tpu.pipeline_mode<synchronous>, transform_indices = @transform_6, window_bounds = array<i64: 64, 32>}, {pipeline_mode = #tpu.pipeline_mode<synchronous>, transform_indices = @transform_7, window_bounds = array<i64: 1, 32>}, {transform_indices = @transform_8, window_bounds = array<i64: 1, 8, 8, 32>}]} {
    %cst = arith.constant 0.000000e+00 : f32
    %0 = vector.broadcast %cst : f32 to vector<1x6x64xf32>
    %c0 = arith.constant 0 : index
    %c0_0 = arith.constant 0 : index
    %c0_1 = arith.constant 0 : index
    %1 = vector.load %arg10[%c0, %c0_0, %c0_1] : memref<6x6x64xf32, #tpu.memory_space<vmem>>, vector<1x6x64xf32>
    tpu.vector_store %arg10[%c0, %c0_0, %c0_1], %0 {strides = array<i32>} : memref<6x6x64xf32, #tpu.memory_space<vmem>>, vector<1x6x64xf32>,
    %cst_2 = arith.constant 0.000000e+00 : f32
    %2 = vector.broadcast %cst_2 : f32 to vector<1x6x64xf32>
    %c5 = arith.constant 5 : index
    %c0_3 = arith.constant 0 : index
    %c0_4 = arith.constant 0 : index
    %3 = vector.load %arg10[%c5, %c0_3, %c0_4] : memref<6x6x64xf32, #tpu.memory_space<vmem>>, vector<1x6x64xf32>
    tpu.vector_store %arg10[%c5, %c0_3, %c0_4], %2 {strides = array<i32>} : memref<6x6x64xf32, #tpu.memory_space<vmem>>, vector<1x6x64xf32>,
    %cst_5 = arith.constant 0.000000e+00 : f32
    %4 = vector.broadcast %cst_5 : f32 to vector<6x1x64xf32>
    %c0_6 = arith.constant 0 : index
    %c0_7 = arith.constant 0 : index
    %c0_8 = arith.constant 0 : index
    %5 = vector.load %arg10[%c0_6, %c0_7, %c0_8] : memref<6x6x64xf32, #tpu.memory_space<vmem>>, vector<6x1x64xf32>
    tpu.vector_store %arg10[%c0_6, %c0_7, %c0_8], %4 {strides = array<i32>} : memref<6x6x64xf32, #tpu.memory_space<vmem>>, vector<6x1x64xf32>,
    %cst_9 = arith.constant 0.000000e+00 : f32
    %6 = vector.broadcast %cst_9 : f32 to vector<6x1x64xf32>
    %c0_10 = arith.constant 0 : index
    %c5_11 = arith.constant 5 : index
    %c0_12 = arith.constant 0 : index
    %7 = vector.load %arg10[%c0_10, %c5_11, %c0_12] : memref<6x6x64xf32, #tpu.memory_space<vmem>>, vector<6x1x64xf32>
    tpu.vector_store %arg10[%c0_10, %c5_11, %c0_12], %6 {strides = array<i32>} : memref<6x6x64xf32, #tpu.memory_space<vmem>>, vector<6x1x64xf32>,
    %cst_13 = arith.constant 0.000000e+00 : f32
    %8 = vector.broadcast %cst_13 : f32 to vector<1x10x64xf32>
    %c0_14 = arith.constant 0 : index
    %c0_15 = arith.constant 0 : index
    %c0_16 = arith.constant 0 : index
    %9 = vector.load %arg11[%c0_14, %c0_15, %c0_16] : memref<10x10x64xf32, #tpu.memory_space<vmem>>, vector<1x10x64xf32>
    tpu.vector_store %arg11[%c0_14, %c0_15, %c0_16], %8 {strides = array<i32>} : memref<10x10x64xf32, #tpu.memory_space<vmem>>, vector<1x10x64xf32>,
    %cst_17 = arith.constant 0.000000e+00 : f32
    %10 = vector.broadcast %cst_17 : f32 to vector<1x10x64xf32>
    %c9 = arith.constant 9 : index
    %c0_18 = arith.constant 0 : index
    %c0_19 = arith.constant 0 : index
    %11 = vector.load %arg11[%c9, %c0_18, %c0_19] : memref<10x10x64xf32, #tpu.memory_space<vmem>>, vector<1x10x64xf32>
    tpu.vector_store %arg11[%c9, %c0_18, %c0_19], %10 {strides = array<i32>} : memref<10x10x64xf32, #tpu.memory_space<vmem>>, vector<1x10x64xf32>,
    %cst_20 = arith.constant 0.000000e+00 : f32
    %12 = vector.broadcast %cst_20 : f32 to vector<10x1x64xf32>
    %c0_21 = arith.constant 0 : index
    %c0_22 = arith.constant 0 : index
    %c0_23 = arith.constant 0 : index
    %13 = vector.load %arg11[%c0_21, %c0_22, %c0_23] : memref<10x10x64xf32, #tpu.memory_space<vmem>>, vector<10x1x64xf32>
    tpu.vector_store %arg11[%c0_21, %c0_22, %c0_23], %12 {strides = array<i32>} : memref<10x10x64xf32, #tpu.memory_space<vmem>>, vector<10x1x64xf32>,
    %cst_24 = arith.constant 0.000000e+00 : f32
    %14 = vector.broadcast %cst_24 : f32 to vector<10x1x64xf32>
    %c0_25 = arith.constant 0 : index
    %c9_26 = arith.constant 9 : index
    %c0_27 = arith.constant 0 : index
    %15 = vector.load %arg11[%c0_25, %c9_26, %c0_27] : memref<10x10x64xf32, #tpu.memory_space<vmem>>, vector<10x1x64xf32>
    tpu.vector_store %arg11[%c0_25, %c9_26, %c0_27], %14 {strides = array<i32>} : memref<10x10x64xf32, #tpu.memory_space<vmem>>, vector<10x1x64xf32>,
    %cst_28 = arith.constant 0.000000e+00 : f32
    %16 = vector.broadcast %cst_28 : f32 to vector<1x10x64xf32>
    %c0_29 = arith.constant 0 : index
    %c0_30 = arith.constant 0 : index
    %c0_31 = arith.constant 0 : index
    %17 = vector.load %arg12[%c0_29, %c0_30, %c0_31] : memref<10x10x64xf32, #tpu.memory_space<vmem>>, vector<1x10x64xf32>
    tpu.vector_store %arg12[%c0_29, %c0_30, %c0_31], %16 {strides = array<i32>} : memref<10x10x64xf32, #tpu.memory_space<vmem>>, vector<1x10x64xf32>,
    %cst_32 = arith.constant 0.000000e+00 : f32
    %18 = vector.broadcast %cst_32 : f32 to vector<1x10x64xf32>
    %c9_33 = arith.constant 9 : index
    %c0_34 = arith.constant 0 : index
    %c0_35 = arith.constant 0 : index
    %19 = vector.load %arg12[%c9_33, %c0_34, %c0_35] : memref<10x10x64xf32, #tpu.memory_space<vmem>>, vector<1x10x64xf32>
    tpu.vector_store %arg12[%c9_33, %c0_34, %c0_35], %18 {strides = array<i32>} : memref<10x10x64xf32, #tpu.memory_space<vmem>>, vector<1x10x64xf32>,
    %cst_36 = arith.constant 0.000000e+00 : f32
    %20 = vector.broadcast %cst_36 : f32 to vector<10x1x64xf32>
    %c0_37 = arith.constant 0 : index
    %c0_38 = arith.constant 0 : index
    %c0_39 = arith.constant 0 : index
    %21 = vector.load %arg12[%c0_37, %c0_38, %c0_39] : memref<10x10x64xf32, #tpu.memory_space<vmem>>, vector<10x1x64xf32>
    tpu.vector_store %arg12[%c0_37, %c0_38, %c0_39], %20 {strides = array<i32>} : memref<10x10x64xf32, #tpu.memory_space<vmem>>, vector<10x1x64xf32>,
    %cst_40 = arith.constant 0.000000e+00 : f32
    %22 = vector.broadcast %cst_40 : f32 to vector<10x1x64xf32>
    %c0_41 = arith.constant 0 : index
    %c9_42 = arith.constant 9 : index
    %c0_43 = arith.constant 0 : index
    %23 = vector.load %arg12[%c0_41, %c9_42, %c0_43] : memref<10x10x64xf32, #tpu.memory_space<vmem>>, vector<10x1x64xf32>
    tpu.vector_store %arg12[%c0_41, %c9_42, %c0_43], %22 {strides = array<i32>} : memref<10x10x64xf32, #tpu.memory_space<vmem>>, vector<10x1x64xf32>,
    %c0_44 = arith.constant 0 : index
    %c0_45 = arith.constant 0 : index
    %c0_46 = arith.constant 0 : index
    %c0_47 = arith.constant 0 : index
    %24 = vector.load %arg1[%c0_44, %c0_45, %c0_46, %c0_47] : memref<1x4x4x64xf32, #tpu.memory_space<vmem>>, vector<1x4x4x64xf32>
    %25 = vector.shape_cast %24 : vector<1x4x4x64xf32> to vector<4x4x64xf32>
    %c1 = arith.constant 1 : index
    %c1_48 = arith.constant 1 : index
    %c0_49 = arith.constant 0 : index
    %26 = vector.load %arg10[%c1, %c1_48, %c0_49] : memref<6x6x64xf32, #tpu.memory_space<vmem>>, vector<4x4x64xf32>
    tpu.vector_store %arg10[%c1, %c1_48, %c0_49], %25 {strides = array<i32>} : memref<6x6x64xf32, #tpu.memory_space<vmem>>, vector<4x4x64xf32>,
    %c0_50 = arith.constant 0 : index
    %c0_51 = arith.constant 0 : index
    %27 = vector.load %arg2[%c0_50, %c0_51] : memref<16x64xf32, #tpu.memory_space<vmem>>, vector<16x64xf32>
    %c0_52 = arith.constant 0 : index
    %c0_53 = arith.constant 0 : index
    %28 = vector.load %arg3[%c0_52, %c0_53] : memref<16x64xf32, #tpu.memory_space<vmem>>, vector<16x64xf32>
    %c0_54 = arith.constant 0 : index
    %c0_55 = arith.constant 0 : index
    %29 = vector.load %arg4[%c0_54, %c0_55] : memref<9x64xf32, #tpu.memory_space<vmem>>, vector<9x64xf32>
    %c0_56 = arith.constant 0 : index
    %c0_57 = arith.constant 0 : index
    %30 = vector.load %arg5[%c0_56, %c0_57] : memref<9x64xf32, #tpu.memory_space<vmem>>, vector<9x64xf32>
    %c0_i32 = arith.constant 0 : i32
    %c2_i32 = arith.constant 2 : i32
    %31 = arith.addi %c0_i32, %c2_i32 : i32
    %c1_i32 = arith.constant 1 : i32
    scf.for %arg13 = %c0_i32 to %31 step %c1_i32  : i32 {
      %c2_i32_69 = arith.constant 2 : i32
      %37 = arith.muli %arg13, %c2_i32_69 : i32
      %38 = arith.index_cast %37 : i32 to index
      %c0_70 = arith.constant 0 : index
      %c0_71 = arith.constant 0 : index
      %39 = vector.load %arg10[%38, %c0_70, %c0_71] : memref<6x6x64xf32, #tpu.memory_space<vmem>>, vector<4x6x64xf32>
      %40 = vector.extract_strided_slice %39 {offsets = [0, 0, 0], sizes = [4, 4, 64], strides = [1, 1, 1]} : vector<4x6x64xf32> to vector<4x4x64xf32>
      %41 = vector.extract_strided_slice %39 {offsets = [0, 1, 0], sizes = [4, 4, 64], strides = [1, 1, 1]} : vector<4x6x64xf32> to vector<4x4x64xf32>
      %42 = vector.extract_strided_slice %39 {offsets = [0, 2, 0], sizes = [4, 4, 64], strides = [1, 1, 1]} : vector<4x6x64xf32> to vector<4x4x64xf32>
      %43 = vector.extract_strided_slice %40 {offsets = [0, 0, 0], sizes = [2, 4, 64], strides = [1, 1, 1]} : vector<4x4x64xf32> to vector<2x4x64xf32>
      %44 = vector.extract_strided_slice %27 {offsets = [0, 0], sizes = [1, 64], strides = [1, 1]} : vector<16x64xf32> to vector<1x64xf32>
      %45 = vector.shape_cast %44 : vector<1x64xf32> to vector<1x1x64xf32>
      %46 = vector.broadcast %45 : vector<1x1x64xf32> to vector<2x4x64xf32>
      %47 = arith.mulf %43, %46 : vector<2x4x64xf32>
      %48 = vector.extract_strided_slice %41 {offsets = [0, 0, 0], sizes = [2, 4, 64], strides = [1, 1, 1]} : vector<4x4x64xf32> to vector<2x4x64xf32>
      %49 = vector.extract_strided_slice %27 {offsets = [1, 0], sizes = [1, 64], strides = [1, 1]} : vector<16x64xf32> to vector<1x64xf32>
      %50 = vector.shape_cast %49 : vector<1x64xf32> to vector<1x1x64xf32>
      %51 = vector.broadcast %50 : vector<1x1x64xf32> to vector<2x4x64xf32>
      %52 = arith.mulf %48, %51 : vector<2x4x64xf32>
      %53 = arith.addf %47, %52 : vector<2x4x64xf32>
      %54 = vector.extract_strided_slice %40 {offsets = [1, 0, 0], sizes = [2, 4, 64], strides = [1, 1, 1]} : vector<4x4x64xf32> to vector<2x4x64xf32>
      %55 = vector.extract_strided_slice %27 {offsets = [2, 0], sizes = [1, 64], strides = [1, 1]} : vector<16x64xf32> to vector<1x64xf32>
      %56 = vector.shape_cast %55 : vector<1x64xf32> to vector<1x1x64xf32>
      %57 = vector.broadcast %56 : vector<1x1x64xf32> to vector<2x4x64xf32>
      %58 = arith.mulf %54, %57 : vector<2x4x64xf32>
      %59 = arith.addf %53, %58 : vector<2x4x64xf32>
      %60 = vector.extract_strided_slice %41 {offsets = [1, 0, 0], sizes = [2, 4, 64], strides = [1, 1, 1]} : vector<4x4x64xf32> to vector<2x4x64xf32>
      %61 = vector.extract_strided_slice %27 {offsets = [3, 0], sizes = [1, 64], strides = [1, 1]} : vector<16x64xf32> to vector<1x64xf32>
      %62 = vector.shape_cast %61 : vector<1x64xf32> to vector<1x1x64xf32>
      %63 = vector.broadcast %62 : vector<1x1x64xf32> to vector<2x4x64xf32>
      %64 = arith.mulf %60, %63 : vector<2x4x64xf32>
      %65 = arith.addf %59, %64 : vector<2x4x64xf32>
      %66 = vector.extract_strided_slice %41 {offsets = [0, 0, 0], sizes = [2, 4, 64], strides = [1, 1, 1]} : vector<4x4x64xf32> to vector<2x4x64xf32>
      %67 = vector.extract_strided_slice %27 {offsets = [4, 0], sizes = [1, 64], strides = [1, 1]} : vector<16x64xf32> to vector<1x64xf32>
      %68 = vector.shape_cast %67 : vector<1x64xf32> to vector<1x1x64xf32>
      %69 = vector.broadcast %68 : vector<1x1x64xf32> to vector<2x4x64xf32>
      %70 = arith.mulf %66, %69 : vector<2x4x64xf32>
      %71 = vector.extract_strided_slice %42 {offsets = [0, 0, 0], sizes = [2, 4, 64], strides = [1, 1, 1]} : vector<4x4x64xf32> to vector<2x4x64xf32>
      %72 = vector.extract_strided_slice %27 {offsets = [5, 0], sizes = [1, 64], strides = [1, 1]} : vector<16x64xf32> to vector<1x64xf32>
      %73 = vector.shape_cast %72 : vector<1x64xf32> to vector<1x1x64xf32>
      %74 = vector.broadcast %73 : vector<1x1x64xf32> to vector<2x4x64xf32>
      %75 = arith.mulf %71, %74 : vector<2x4x64xf32>
      %76 = arith.addf %70, %75 : vector<2x4x64xf32>
      %77 = vector.extract_strided_slice %41 {offsets = [1, 0, 0], sizes = [2, 4, 64], strides = [1, 1, 1]} : vector<4x4x64xf32> to vector<2x4x64xf32>
      %78 = vector.extract_strided_slice %27 {offsets = [6, 0], sizes = [1, 64], strides = [1, 1]} : vector<16x64xf32> to vector<1x64xf32>
      %79 = vector.shape_cast %78 : vector<1x64xf32> to vector<1x1x64xf32>
      %80 = vector.broadcast %79 : vector<1x1x64xf32> to vector<2x4x64xf32>
      %81 = arith.mulf %77, %80 : vector<2x4x64xf32>
      %82 = arith.addf %76, %81 : vector<2x4x64xf32>
      %83 = vector.extract_strided_slice %42 {offsets = [1, 0, 0], sizes = [2, 4, 64], strides = [1, 1, 1]} : vector<4x4x64xf32> to vector<2x4x64xf32>
      %84 = vector.extract_strided_slice %27 {offsets = [7, 0], sizes = [1, 64], strides = [1, 1]} : vector<16x64xf32> to vector<1x64xf32>
      %85 = vector.shape_cast %84 : vector<1x64xf32> to vector<1x1x64xf32>
      %86 = vector.broadcast %85 : vector<1x1x64xf32> to vector<2x4x64xf32>
      %87 = arith.mulf %83, %86 : vector<2x4x64xf32>
      %88 = arith.addf %82, %87 : vector<2x4x64xf32>
      %89 = vector.shape_cast %65 : vector<2x4x64xf32> to vector<2x4x1x64xf32>
      %90 = vector.shape_cast %88 : vector<2x4x64xf32> to vector<2x4x1x64xf32>
      %91 = tpu.concatenate %89, %90 in 2 : vector<2x4x1x64xf32>, vector<2x4x1x64xf32> -> vector<2x4x2x64xf32>
      %92 = vector.shape_cast %91 : vector<2x4x2x64xf32> to vector<2x8x64xf32>
      %93 = vector.extract_strided_slice %40 {offsets = [1, 0, 0], sizes = [2, 4, 64], strides = [1, 1, 1]} : vector<4x4x64xf32> to vector<2x4x64xf32>
      %94 = vector.extract_strided_slice %27 {offsets = [8, 0], sizes = [1, 64], strides = [1, 1]} : vector<16x64xf32> to vector<1x64xf32>
      %95 = vector.shape_cast %94 : vector<1x64xf32> to vector<1x1x64xf32>
      %96 = vector.broadcast %95 : vector<1x1x64xf32> to vector<2x4x64xf32>
      %97 = arith.mulf %93, %96 : vector<2x4x64xf32>
      %98 = vector.extract_strided_slice %41 {offsets = [1, 0, 0], sizes = [2, 4, 64], strides = [1, 1, 1]} : vector<4x4x64xf32> to vector<2x4x64xf32>
      %99 = vector.extract_strided_slice %27 {offsets = [9, 0], sizes = [1, 64], strides = [1, 1]} : vector<16x64xf32> to vector<1x64xf32>
      %100 = vector.shape_cast %99 : vector<1x64xf32> to vector<1x1x64xf32>
      %101 = vector.broadcast %100 : vector<1x1x64xf32> to vector<2x4x64xf32>
      %102 = arith.mulf %98, %101 : vector<2x4x64xf32>
      %103 = arith.addf %97, %102 : vector<2x4x64xf32>
      %104 = vector.extract_strided_slice %40 {offsets = [2, 0, 0], sizes = [2, 4, 64], strides = [1, 1, 1]} : vector<4x4x64xf32> to vector<2x4x64xf32>
      %105 = vector.extract_strided_slice %27 {offsets = [10, 0], sizes = [1, 64], strides = [1, 1]} : vector<16x64xf32> to vector<1x64xf32>
      %106 = vector.shape_cast %105 : vector<1x64xf32> to vector<1x1x64xf32>
      %107 = vector.broadcast %106 : vector<1x1x64xf32> to vector<2x4x64xf32>
      %108 = arith.mulf %104, %107 : vector<2x4x64xf32>
      %109 = arith.addf %103, %108 : vector<2x4x64xf32>
      %110 = vector.extract_strided_slice %41 {offsets = [2, 0, 0], sizes = [2, 4, 64], strides = [1, 1, 1]} : vector<4x4x64xf32> to vector<2x4x64xf32>
      %111 = vector.extract_strided_slice %27 {offsets = [11, 0], sizes = [1, 64], strides = [1, 1]} : vector<16x64xf32> to vector<1x64xf32>
      %112 = vector.shape_cast %111 : vector<1x64xf32> to vector<1x1x64xf32>
      %113 = vector.broadcast %112 : vector<1x1x64xf32> to vector<2x4x64xf32>
      %114 = arith.mulf %110, %113 : vector<2x4x64xf32>
      %115 = arith.addf %109, %114 : vector<2x4x64xf32>
      %116 = vector.extract_strided_slice %41 {offsets = [1, 0, 0], sizes = [2, 4, 64], strides = [1, 1, 1]} : vector<4x4x64xf32> to vector<2x4x64xf32>
      %117 = vector.extract_strided_slice %27 {offsets = [12, 0], sizes = [1, 64], strides = [1, 1]} : vector<16x64xf32> to vector<1x64xf32>
      %118 = vector.shape_cast %117 : vector<1x64xf32> to vector<1x1x64xf32>
      %119 = vector.broadcast %118 : vector<1x1x64xf32> to vector<2x4x64xf32>
      %120 = arith.mulf %116, %119 : vector<2x4x64xf32>
      %121 = vector.extract_strided_slice %42 {offsets = [1, 0, 0], sizes = [2, 4, 64], strides = [1, 1, 1]} : vector<4x4x64xf32> to vector<2x4x64xf32>
      %122 = vector.extract_strided_slice %27 {offsets = [13, 0], sizes = [1, 64], strides = [1, 1]} : vector<16x64xf32> to vector<1x64xf32>
      %123 = vector.shape_cast %122 : vector<1x64xf32> to vector<1x1x64xf32>
      %124 = vector.broadcast %123 : vector<1x1x64xf32> to vector<2x4x64xf32>
      %125 = arith.mulf %121, %124 : vector<2x4x64xf32>
      %126 = arith.addf %120, %125 : vector<2x4x64xf32>
      %127 = vector.extract_strided_slice %41 {offsets = [2, 0, 0], sizes = [2, 4, 64], strides = [1, 1, 1]} : vector<4x4x64xf32> to vector<2x4x64xf32>
      %128 = vector.extract_strided_slice %27 {offsets = [14, 0], sizes = [1, 64], strides = [1, 1]} : vector<16x64xf32> to vector<1x64xf32>
      %129 = vector.shape_cast %128 : vector<1x64xf32> to vector<1x1x64xf32>
      %130 = vector.broadcast %129 : vector<1x1x64xf32> to vector<2x4x64xf32>
      %131 = arith.mulf %127, %130 : vector<2x4x64xf32>
      %132 = arith.addf %126, %131 : vector<2x4x64xf32>
      %133 = vector.extract_strided_slice %42 {offsets = [2, 0, 0], sizes = [2, 4, 64], strides = [1, 1, 1]} : vector<4x4x64xf32> to vector<2x4x64xf32>
      %134 = vector.extract_strided_slice %27 {offsets = [15, 0], sizes = [1, 64], strides = [1, 1]} : vector<16x64xf32> to vector<1x64xf32>
      %135 = vector.shape_cast %134 : vector<1x64xf32> to vector<1x1x64xf32>
      %136 = vector.broadcast %135 : vector<1x1x64xf32> to vector<2x4x64xf32>
      %137 = arith.mulf %133, %136 : vector<2x4x64xf32>
      %138 = arith.addf %132, %137 : vector<2x4x64xf32>
      %139 = vector.shape_cast %115 : vector<2x4x64xf32> to vector<2x4x1x64xf32>
      %140 = vector.shape_cast %138 : vector<2x4x64xf32> to vector<2x4x1x64xf32>
      %141 = tpu.concatenate %139, %140 in 2 : vector<2x4x1x64xf32>, vector<2x4x1x64xf32> -> vector<2x4x2x64xf32>
      %142 = vector.shape_cast %141 : vector<2x4x2x64xf32> to vector<2x8x64xf32>
      %143 = vector.shape_cast %92 : vector<2x8x64xf32> to vector<2x1x8x64xf32>
      %144 = vector.shape_cast %142 : vector<2x8x64xf32> to vector<2x1x8x64xf32>
      %145 = tpu.concatenate %143, %144 in 1 : vector<2x1x8x64xf32>, vector<2x1x8x64xf32> -> vector<2x2x8x64xf32>
      %146 = vector.shape_cast %145 : vector<2x2x8x64xf32> to vector<4x8x64xf32>
      %c2_i32_72 = arith.constant 2 : i32
      %147 = arith.muli %c2_i32_72, %37 : i32
      %c1_i32_73 = arith.constant 1 : i32
      %148 = arith.addi %c1_i32_73, %147 : i32
      %149 = arith.index_cast %148 : i32 to index
      %c1_74 = arith.constant 1 : index
      %c0_75 = arith.constant 0 : index
      %150 = vector.load %arg11[%149, %c1_74, %c0_75] : memref<10x10x64xf32, #tpu.memory_space<vmem>>, vector<4x8x64xf32>
      tpu.vector_store %arg11[%149, %c1_74, %c0_75], %146 {strides = array<i32>} : memref<10x10x64xf32, #tpu.memory_space<vmem>>, vector<4x8x64xf32>,
      %151 = vector.extract_strided_slice %40 {offsets = [0, 0, 0], sizes = [2, 4, 64], strides = [1, 1, 1]} : vector<4x4x64xf32> to vector<2x4x64xf32>
      %152 = vector.extract_strided_slice %28 {offsets = [0, 0], sizes = [1, 64], strides = [1, 1]} : vector<16x64xf32> to vector<1x64xf32>
      %153 = vector.shape_cast %152 : vector<1x64xf32> to vector<1x1x64xf32>
      %154 = vector.broadcast %153 : vector<1x1x64xf32> to vector<2x4x64xf32>
      %155 = arith.mulf %151, %154 : vector<2x4x64xf32>
      %156 = vector.extract_strided_slice %41 {offsets = [0, 0, 0], sizes = [2, 4, 64], strides = [1, 1, 1]} : vector<4x4x64xf32> to vector<2x4x64xf32>
      %157 = vector.extract_strided_slice %28 {offsets = [1, 0], sizes = [1, 64], strides = [1, 1]} : vector<16x64xf32> to vector<1x64xf32>
      %158 = vector.shape_cast %157 : vector<1x64xf32> to vector<1x1x64xf32>
      %159 = vector.broadcast %158 : vector<1x1x64xf32> to vector<2x4x64xf32>
      %160 = arith.mulf %156, %159 : vector<2x4x64xf32>
      %161 = arith.addf %155, %160 : vector<2x4x64xf32>
      %162 = vector.extract_strided_slice %40 {offsets = [1, 0, 0], sizes = [2, 4, 64], strides = [1, 1, 1]} : vector<4x4x64xf32> to vector<2x4x64xf32>
      %163 = vector.extract_strided_slice %28 {offsets = [2, 0], sizes = [1, 64], strides = [1, 1]} : vector<16x64xf32> to vector<1x64xf32>
      %164 = vector.shape_cast %163 : vector<1x64xf32> to vector<1x1x64xf32>
      %165 = vector.broadcast %164 : vector<1x1x64xf32> to vector<2x4x64xf32>
      %166 = arith.mulf %162, %165 : vector<2x4x64xf32>
      %167 = arith.addf %161, %166 : vector<2x4x64xf32>
      %168 = vector.extract_strided_slice %41 {offsets = [1, 0, 0], sizes = [2, 4, 64], strides = [1, 1, 1]} : vector<4x4x64xf32> to vector<2x4x64xf32>
      %169 = vector.extract_strided_slice %28 {offsets = [3, 0], sizes = [1, 64], strides = [1, 1]} : vector<16x64xf32> to vector<1x64xf32>
      %170 = vector.shape_cast %169 : vector<1x64xf32> to vector<1x1x64xf32>
      %171 = vector.broadcast %170 : vector<1x1x64xf32> to vector<2x4x64xf32>
      %172 = arith.mulf %168, %171 : vector<2x4x64xf32>
      %173 = arith.addf %167, %172 : vector<2x4x64xf32>
      %174 = vector.extract_strided_slice %41 {offsets = [0, 0, 0], sizes = [2, 4, 64], strides = [1, 1, 1]} : vector<4x4x64xf32> to vector<2x4x64xf32>
      %175 = vector.extract_strided_slice %28 {offsets = [4, 0], sizes = [1, 64], strides = [1, 1]} : vector<16x64xf32> to vector<1x64xf32>
      %176 = vector.shape_cast %175 : vector<1x64xf32> to vector<1x1x64xf32>
      %177 = vector.broadcast %176 : vector<1x1x64xf32> to vector<2x4x64xf32>
      %178 = arith.mulf %174, %177 : vector<2x4x64xf32>
      %179 = vector.extract_strided_slice %42 {offsets = [0, 0, 0], sizes = [2, 4, 64], strides = [1, 1, 1]} : vector<4x4x64xf32> to vector<2x4x64xf32>
      %180 = vector.extract_strided_slice %28 {offsets = [5, 0], sizes = [1, 64], strides = [1, 1]} : vector<16x64xf32> to vector<1x64xf32>
      %181 = vector.shape_cast %180 : vector<1x64xf32> to vector<1x1x64xf32>
      %182 = vector.broadcast %181 : vector<1x1x64xf32> to vector<2x4x64xf32>
      %183 = arith.mulf %179, %182 : vector<2x4x64xf32>
      %184 = arith.addf %178, %183 : vector<2x4x64xf32>
      %185 = vector.extract_strided_slice %41 {offsets = [1, 0, 0], sizes = [2, 4, 64], strides = [1, 1, 1]} : vector<4x4x64xf32> to vector<2x4x64xf32>
      %186 = vector.extract_strided_slice %28 {offsets = [6, 0], sizes = [1, 64], strides = [1, 1]} : vector<16x64xf32> to vector<1x64xf32>
      %187 = vector.shape_cast %186 : vector<1x64xf32> to vector<1x1x64xf32>
      %188 = vector.broadcast %187 : vector<1x1x64xf32> to vector<2x4x64xf32>
      %189 = arith.mulf %185, %188 : vector<2x4x64xf32>
      %190 = arith.addf %184, %189 : vector<2x4x64xf32>
      %191 = vector.extract_strided_slice %42 {offsets = [1, 0, 0], sizes = [2, 4, 64], strides = [1, 1, 1]} : vector<4x4x64xf32> to vector<2x4x64xf32>
      %192 = vector.extract_strided_slice %28 {offsets = [7, 0], sizes = [1, 64], strides = [1, 1]} : vector<16x64xf32> to vector<1x64xf32>
      %193 = vector.shape_cast %192 : vector<1x64xf32> to vector<1x1x64xf32>
      %194 = vector.broadcast %193 : vector<1x1x64xf32> to vector<2x4x64xf32>
      %195 = arith.mulf %191, %194 : vector<2x4x64xf32>
      %196 = arith.addf %190, %195 : vector<2x4x64xf32>
      %197 = vector.shape_cast %173 : vector<2x4x64xf32> to vector<2x4x1x64xf32>
      %198 = vector.shape_cast %196 : vector<2x4x64xf32> to vector<2x4x1x64xf32>
      %199 = tpu.concatenate %197, %198 in 2 : vector<2x4x1x64xf32>, vector<2x4x1x64xf32> -> vector<2x4x2x64xf32>
      %200 = vector.shape_cast %199 : vector<2x4x2x64xf32> to vector<2x8x64xf32>
      %201 = vector.extract_strided_slice %40 {offsets = [1, 0, 0], sizes = [2, 4, 64], strides = [1, 1, 1]} : vector<4x4x64xf32> to vector<2x4x64xf32>
      %202 = vector.extract_strided_slice %28 {offsets = [8, 0], sizes = [1, 64], strides = [1, 1]} : vector<16x64xf32> to vector<1x64xf32>
      %203 = vector.shape_cast %202 : vector<1x64xf32> to vector<1x1x64xf32>
      %204 = vector.broadcast %203 : vector<1x1x64xf32> to vector<2x4x64xf32>
      %205 = arith.mulf %201, %204 : vector<2x4x64xf32>
      %206 = vector.extract_strided_slice %41 {offsets = [1, 0, 0], sizes = [2, 4, 64], strides = [1, 1, 1]} : vector<4x4x64xf32> to vector<2x4x64xf32>
      %207 = vector.extract_strided_slice %28 {offsets = [9, 0], sizes = [1, 64], strides = [1, 1]} : vector<16x64xf32> to vector<1x64xf32>
      %208 = vector.shape_cast %207 : vector<1x64xf32> to vector<1x1x64xf32>
      %209 = vector.broadcast %208 : vector<1x1x64xf32> to vector<2x4x64xf32>
      %210 = arith.mulf %206, %209 : vector<2x4x64xf32>
      %211 = arith.addf %205, %210 : vector<2x4x64xf32>
      %212 = vector.extract_strided_slice %40 {offsets = [2, 0, 0], sizes = [2, 4, 64], strides = [1, 1, 1]} : vector<4x4x64xf32> to vector<2x4x64xf32>
      %213 = vector.extract_strided_slice %28 {offsets = [10, 0], sizes = [1, 64], strides = [1, 1]} : vector<16x64xf32> to vector<1x64xf32>
      %214 = vector.shape_cast %213 : vector<1x64xf32> to vector<1x1x64xf32>
      %215 = vector.broadcast %214 : vector<1x1x64xf32> to vector<2x4x64xf32>
      %216 = arith.mulf %212, %215 : vector<2x4x64xf32>
      %217 = arith.addf %211, %216 : vector<2x4x64xf32>
      %218 = vector.extract_strided_slice %41 {offsets = [2, 0, 0], sizes = [2, 4, 64], strides = [1, 1, 1]} : vector<4x4x64xf32> to vector<2x4x64xf32>
      %219 = vector.extract_strided_slice %28 {offsets = [11, 0], sizes = [1, 64], strides = [1, 1]} : vector<16x64xf32> to vector<1x64xf32>
      %220 = vector.shape_cast %219 : vector<1x64xf32> to vector<1x1x64xf32>
      %221 = vector.broadcast %220 : vector<1x1x64xf32> to vector<2x4x64xf32>
      %222 = arith.mulf %218, %221 : vector<2x4x64xf32>
      %223 = arith.addf %217, %222 : vector<2x4x64xf32>
      %224 = vector.extract_strided_slice %41 {offsets = [1, 0, 0], sizes = [2, 4, 64], strides = [1, 1, 1]} : vector<4x4x64xf32> to vector<2x4x64xf32>
      %225 = vector.extract_strided_slice %28 {offsets = [12, 0], sizes = [1, 64], strides = [1, 1]} : vector<16x64xf32> to vector<1x64xf32>
      %226 = vector.shape_cast %225 : vector<1x64xf32> to vector<1x1x64xf32>
      %227 = vector.broadcast %226 : vector<1x1x64xf32> to vector<2x4x64xf32>
      %228 = arith.mulf %224, %227 : vector<2x4x64xf32>
      %229 = vector.extract_strided_slice %42 {offsets = [1, 0, 0], sizes = [2, 4, 64], strides = [1, 1, 1]} : vector<4x4x64xf32> to vector<2x4x64xf32>
      %230 = vector.extract_strided_slice %28 {offsets = [13, 0], sizes = [1, 64], strides = [1, 1]} : vector<16x64xf32> to vector<1x64xf32>
      %231 = vector.shape_cast %230 : vector<1x64xf32> to vector<1x1x64xf32>
      %232 = vector.broadcast %231 : vector<1x1x64xf32> to vector<2x4x64xf32>
      %233 = arith.mulf %229, %232 : vector<2x4x64xf32>
      %234 = arith.addf %228, %233 : vector<2x4x64xf32>
      %235 = vector.extract_strided_slice %41 {offsets = [2, 0, 0], sizes = [2, 4, 64], strides = [1, 1, 1]} : vector<4x4x64xf32> to vector<2x4x64xf32>
      %236 = vector.extract_strided_slice %28 {offsets = [14, 0], sizes = [1, 64], strides = [1, 1]} : vector<16x64xf32> to vector<1x64xf32>
      %237 = vector.shape_cast %236 : vector<1x64xf32> to vector<1x1x64xf32>
      %238 = vector.broadcast %237 : vector<1x1x64xf32> to vector<2x4x64xf32>
      %239 = arith.mulf %235, %238 : vector<2x4x64xf32>
      %240 = arith.addf %234, %239 : vector<2x4x64xf32>
      %241 = vector.extract_strided_slice %42 {offsets = [2, 0, 0], sizes = [2, 4, 64], strides = [1, 1, 1]} : vector<4x4x64xf32> to vector<2x4x64xf32>
      %242 = vector.extract_strided_slice %28 {offsets = [15, 0], sizes = [1, 64], strides = [1, 1]} : vector<16x64xf32> to vector<1x64xf32>
      %243 = vector.shape_cast %242 : vector<1x64xf32> to vector<1x1x64xf32>
      %244 = vector.broadcast %243 : vector<1x1x64xf32> to vector<2x4x64xf32>
      %245 = arith.mulf %241, %244 : vector<2x4x64xf32>
      %246 = arith.addf %240, %245 : vector<2x4x64xf32>
      %247 = vector.shape_cast %223 : vector<2x4x64xf32> to vector<2x4x1x64xf32>
      %248 = vector.shape_cast %246 : vector<2x4x64xf32> to vector<2x4x1x64xf32>
      %249 = tpu.concatenate %247, %248 in 2 : vector<2x4x1x64xf32>, vector<2x4x1x64xf32> -> vector<2x4x2x64xf32>
      %250 = vector.shape_cast %249 : vector<2x4x2x64xf32> to vector<2x8x64xf32>
      %251 = vector.shape_cast %200 : vector<2x8x64xf32> to vector<2x1x8x64xf32>
      %252 = vector.shape_cast %250 : vector<2x8x64xf32> to vector<2x1x8x64xf32>
      %253 = tpu.concatenate %251, %252 in 1 : vector<2x1x8x64xf32>, vector<2x1x8x64xf32> -> vector<2x2x8x64xf32>
      %254 = vector.shape_cast %253 : vector<2x2x8x64xf32> to vector<4x8x64xf32>
      %c2_i32_76 = arith.constant 2 : i32
      %255 = arith.muli %c2_i32_76, %37 : i32
      %c1_i32_77 = arith.constant 1 : i32
      %256 = arith.addi %c1_i32_77, %255 : i32
      %257 = arith.index_cast %256 : i32 to index
      %c1_78 = arith.constant 1 : index
      %c0_79 = arith.constant 0 : index
      %258 = vector.load %arg12[%257, %c1_78, %c0_79] : memref<10x10x64xf32, #tpu.memory_space<vmem>>, vector<4x8x64xf32>
      tpu.vector_store %arg12[%257, %c1_78, %c0_79], %254 {strides = array<i32>} : memref<10x10x64xf32, #tpu.memory_space<vmem>>, vector<4x8x64xf32>,
    }
    %c2_i32_58 = arith.constant 2 : i32
    %c0_59 = arith.constant 0 : index
    %c0_60 = arith.constant 0 : index
    %32 = vector.load %arg6[%c0_59, %c0_60] : memref<1x64xf32, #tpu.memory_space<vmem>>, vector<1x64xf32>
    %33 = vector.shape_cast %32 : vector<1x64xf32> to vector<1x1x64xf32>
    %c0_61 = arith.constant 0 : index
    %c0_62 = arith.constant 0 : index
    %34 = vector.load %arg7[%c0_61, %c0_62] : memref<64x32xf32, #tpu.memory_space<vmem>>, vector<64x32xf32>
    %c0_63 = arith.constant 0 : index
    %c0_64 = arith.constant 0 : index
    %35 = vector.load %arg8[%c0_63, %c0_64] : memref<1x32xf32, #tpu.memory_space<vmem>>, vector<1x32xf32>
    %c0_i32_65 = arith.constant 0 : i32
    %c2_i32_66 = arith.constant 2 : i32
    %36 = arith.addi %c0_i32_65, %c2_i32_66 : i32
    %c1_i32_67 = arith.constant 1 : i32
    scf.for %arg13 = %c0_i32_65 to %36 step %c1_i32_67  : i32 {
      %c4_i32 = arith.constant 4 : i32
      %37 = arith.muli %arg13, %c4_i32 : i32
      %c0_i32_69 = arith.constant 0 : i32
      %38 = arith.addi %37, %c0_i32_69 : i32
      %39 = arith.index_cast %38 : i32 to index
      %c0_70 = arith.constant 0 : index
      %c0_71 = arith.constant 0 : index
      %40 = vector.load %arg11[%39, %c0_70, %c0_71] : memref<10x10x64xf32, #tpu.memory_space<vmem>>, vector<4x10x64xf32>
      %41 = vector.extract_strided_slice %40 {offsets = [0, 0, 0], sizes = [4, 8, 64], strides = [1, 1, 1]} : vector<4x10x64xf32> to vector<4x8x64xf32>
      %42 = vector.extract_strided_slice %29 {offsets = [0, 0], sizes = [1, 64], strides = [1, 1]} : vector<9x64xf32> to vector<1x64xf32>
      %43 = vector.shape_cast %42 : vector<1x64xf32> to vector<1x1x64xf32>
      %44 = vector.broadcast %43 : vector<1x1x64xf32> to vector<4x8x64xf32>
      %45 = arith.mulf %41, %44 : vector<4x8x64xf32>
      %46 = vector.extract_strided_slice %40 {offsets = [0, 1, 0], sizes = [4, 8, 64], strides = [1, 1, 1]} : vector<4x10x64xf32> to vector<4x8x64xf32>
      %47 = vector.extract_strided_slice %29 {offsets = [1, 0], sizes = [1, 64], strides = [1, 1]} : vector<9x64xf32> to vector<1x64xf32>
      %48 = vector.shape_cast %47 : vector<1x64xf32> to vector<1x1x64xf32>
      %49 = vector.broadcast %48 : vector<1x1x64xf32> to vector<4x8x64xf32>
      %50 = arith.mulf %46, %49 : vector<4x8x64xf32>
      %51 = arith.addf %45, %50 : vector<4x8x64xf32>
      %52 = vector.extract_strided_slice %40 {offsets = [0, 2, 0], sizes = [4, 8, 64], strides = [1, 1, 1]} : vector<4x10x64xf32> to vector<4x8x64xf32>
      %53 = vector.extract_strided_slice %29 {offsets = [2, 0], sizes = [1, 64], strides = [1, 1]} : vector<9x64xf32> to vector<1x64xf32>
      %54 = vector.shape_cast %53 : vector<1x64xf32> to vector<1x1x64xf32>
      %55 = vector.broadcast %54 : vector<1x1x64xf32> to vector<4x8x64xf32>
      %56 = arith.mulf %52, %55 : vector<4x8x64xf32>
      %57 = arith.addf %51, %56 : vector<4x8x64xf32>
      %c1_i32_72 = arith.constant 1 : i32
      %58 = arith.addi %37, %c1_i32_72 : i32
      %59 = arith.index_cast %58 : i32 to index
      %c0_73 = arith.constant 0 : index
      %c0_74 = arith.constant 0 : index
      %60 = vector.load %arg11[%59, %c0_73, %c0_74] : memref<10x10x64xf32, #tpu.memory_space<vmem>>, vector<4x10x64xf32>
      %61 = vector.extract_strided_slice %60 {offsets = [0, 0, 0], sizes = [4, 8, 64], strides = [1, 1, 1]} : vector<4x10x64xf32> to vector<4x8x64xf32>
      %62 = vector.extract_strided_slice %29 {offsets = [3, 0], sizes = [1, 64], strides = [1, 1]} : vector<9x64xf32> to vector<1x64xf32>
      %63 = vector.shape_cast %62 : vector<1x64xf32> to vector<1x1x64xf32>
      %64 = vector.broadcast %63 : vector<1x1x64xf32> to vector<4x8x64xf32>
      %65 = arith.mulf %61, %64 : vector<4x8x64xf32>
      %66 = arith.addf %57, %65 : vector<4x8x64xf32>
      %67 = vector.extract_strided_slice %60 {offsets = [0, 1, 0], sizes = [4, 8, 64], strides = [1, 1, 1]} : vector<4x10x64xf32> to vector<4x8x64xf32>
      %68 = vector.extract_strided_slice %29 {offsets = [4, 0], sizes = [1, 64], strides = [1, 1]} : vector<9x64xf32> to vector<1x64xf32>
      %69 = vector.shape_cast %68 : vector<1x64xf32> to vector<1x1x64xf32>
      %70 = vector.broadcast %69 : vector<1x1x64xf32> to vector<4x8x64xf32>
      %71 = arith.mulf %67, %70 : vector<4x8x64xf32>
      %72 = arith.addf %66, %71 : vector<4x8x64xf32>
      %73 = vector.extract_strided_slice %60 {offsets = [0, 2, 0], sizes = [4, 8, 64], strides = [1, 1, 1]} : vector<4x10x64xf32> to vector<4x8x64xf32>
      %74 = vector.extract_strided_slice %29 {offsets = [5, 0], sizes = [1, 64], strides = [1, 1]} : vector<9x64xf32> to vector<1x64xf32>
      %75 = vector.shape_cast %74 : vector<1x64xf32> to vector<1x1x64xf32>
      %76 = vector.broadcast %75 : vector<1x1x64xf32> to vector<4x8x64xf32>
      %77 = arith.mulf %73, %76 : vector<4x8x64xf32>
      %78 = arith.addf %72, %77 : vector<4x8x64xf32>
      %c2_i32_75 = arith.constant 2 : i32
      %79 = arith.addi %37, %c2_i32_75 : i32
      %80 = arith.index_cast %79 : i32 to index
      %c0_76 = arith.constant 0 : index
      %c0_77 = arith.constant 0 : index
      %81 = vector.load %arg11[%80, %c0_76, %c0_77] : memref<10x10x64xf32, #tpu.memory_space<vmem>>, vector<4x10x64xf32>
      %82 = vector.extract_strided_slice %81 {offsets = [0, 0, 0], sizes = [4, 8, 64], strides = [1, 1, 1]} : vector<4x10x64xf32> to vector<4x8x64xf32>
      %83 = vector.extract_strided_slice %29 {offsets = [6, 0], sizes = [1, 64], strides = [1, 1]} : vector<9x64xf32> to vector<1x64xf32>
      %84 = vector.shape_cast %83 : vector<1x64xf32> to vector<1x1x64xf32>
      %85 = vector.broadcast %84 : vector<1x1x64xf32> to vector<4x8x64xf32>
      %86 = arith.mulf %82, %85 : vector<4x8x64xf32>
      %87 = arith.addf %78, %86 : vector<4x8x64xf32>
      %88 = vector.extract_strided_slice %81 {offsets = [0, 1, 0], sizes = [4, 8, 64], strides = [1, 1, 1]} : vector<4x10x64xf32> to vector<4x8x64xf32>
      %89 = vector.extract_strided_slice %29 {offsets = [7, 0], sizes = [1, 64], strides = [1, 1]} : vector<9x64xf32> to vector<1x64xf32>
      %90 = vector.shape_cast %89 : vector<1x64xf32> to vector<1x1x64xf32>
      %91 = vector.broadcast %90 : vector<1x1x64xf32> to vector<4x8x64xf32>
      %92 = arith.mulf %88, %91 : vector<4x8x64xf32>
      %93 = arith.addf %87, %92 : vector<4x8x64xf32>
      %94 = vector.extract_strided_slice %81 {offsets = [0, 2, 0], sizes = [4, 8, 64], strides = [1, 1, 1]} : vector<4x10x64xf32> to vector<4x8x64xf32>
      %95 = vector.extract_strided_slice %29 {offsets = [8, 0], sizes = [1, 64], strides = [1, 1]} : vector<9x64xf32> to vector<1x64xf32>
      %96 = vector.shape_cast %95 : vector<1x64xf32> to vector<1x1x64xf32>
      %97 = vector.broadcast %96 : vector<1x1x64xf32> to vector<4x8x64xf32>
      %98 = arith.mulf %94, %97 : vector<4x8x64xf32>
      %99 = arith.addf %93, %98 : vector<4x8x64xf32>
      %c0_i32_78 = arith.constant 0 : i32
      %100 = arith.addi %37, %c0_i32_78 : i32
      %101 = arith.index_cast %100 : i32 to index
      %c0_79 = arith.constant 0 : index
      %c0_80 = arith.constant 0 : index
      %102 = vector.load %arg12[%101, %c0_79, %c0_80] : memref<10x10x64xf32, #tpu.memory_space<vmem>>, vector<4x10x64xf32>
      %103 = vector.extract_strided_slice %102 {offsets = [0, 0, 0], sizes = [4, 8, 64], strides = [1, 1, 1]} : vector<4x10x64xf32> to vector<4x8x64xf32>
      %104 = vector.extract_strided_slice %30 {offsets = [0, 0], sizes = [1, 64], strides = [1, 1]} : vector<9x64xf32> to vector<1x64xf32>
      %105 = vector.shape_cast %104 : vector<1x64xf32> to vector<1x1x64xf32>
      %106 = vector.broadcast %105 : vector<1x1x64xf32> to vector<4x8x64xf32>
      %107 = arith.mulf %103, %106 : vector<4x8x64xf32>
      %108 = arith.addf %99, %107 : vector<4x8x64xf32>
      %109 = vector.extract_strided_slice %102 {offsets = [0, 1, 0], sizes = [4, 8, 64], strides = [1, 1, 1]} : vector<4x10x64xf32> to vector<4x8x64xf32>
      %110 = vector.extract_strided_slice %30 {offsets = [1, 0], sizes = [1, 64], strides = [1, 1]} : vector<9x64xf32> to vector<1x64xf32>
      %111 = vector.shape_cast %110 : vector<1x64xf32> to vector<1x1x64xf32>
      %112 = vector.broadcast %111 : vector<1x1x64xf32> to vector<4x8x64xf32>
      %113 = arith.mulf %109, %112 : vector<4x8x64xf32>
      %114 = arith.addf %108, %113 : vector<4x8x64xf32>
      %115 = vector.extract_strided_slice %102 {offsets = [0, 2, 0], sizes = [4, 8, 64], strides = [1, 1, 1]} : vector<4x10x64xf32> to vector<4x8x64xf32>
      %116 = vector.extract_strided_slice %30 {offsets = [2, 0], sizes = [1, 64], strides = [1, 1]} : vector<9x64xf32> to vector<1x64xf32>
      %117 = vector.shape_cast %116 : vector<1x64xf32> to vector<1x1x64xf32>
      %118 = vector.broadcast %117 : vector<1x1x64xf32> to vector<4x8x64xf32>
      %119 = arith.mulf %115, %118 : vector<4x8x64xf32>
      %120 = arith.addf %114, %119 : vector<4x8x64xf32>
      %c1_i32_81 = arith.constant 1 : i32
      %121 = arith.addi %37, %c1_i32_81 : i32
      %122 = arith.index_cast %121 : i32 to index
      %c0_82 = arith.constant 0 : index
      %c0_83 = arith.constant 0 : index
      %123 = vector.load %arg12[%122, %c0_82, %c0_83] : memref<10x10x64xf32, #tpu.memory_space<vmem>>, vector<4x10x64xf32>
      %124 = vector.extract_strided_slice %123 {offsets = [0, 0, 0], sizes = [4, 8, 64], strides = [1, 1, 1]} : vector<4x10x64xf32> to vector<4x8x64xf32>
      %125 = vector.extract_strided_slice %30 {offsets = [3, 0], sizes = [1, 64], strides = [1, 1]} : vector<9x64xf32> to vector<1x64xf32>
      %126 = vector.shape_cast %125 : vector<1x64xf32> to vector<1x1x64xf32>
      %127 = vector.broadcast %126 : vector<1x1x64xf32> to vector<4x8x64xf32>
      %128 = arith.mulf %124, %127 : vector<4x8x64xf32>
      %129 = arith.addf %120, %128 : vector<4x8x64xf32>
      %130 = vector.extract_strided_slice %123 {offsets = [0, 1, 0], sizes = [4, 8, 64], strides = [1, 1, 1]} : vector<4x10x64xf32> to vector<4x8x64xf32>
      %131 = vector.extract_strided_slice %30 {offsets = [4, 0], sizes = [1, 64], strides = [1, 1]} : vector<9x64xf32> to vector<1x64xf32>
      %132 = vector.shape_cast %131 : vector<1x64xf32> to vector<1x1x64xf32>
      %133 = vector.broadcast %132 : vector<1x1x64xf32> to vector<4x8x64xf32>
      %134 = arith.mulf %130, %133 : vector<4x8x64xf32>
      %135 = arith.addf %129, %134 : vector<4x8x64xf32>
      %136 = vector.extract_strided_slice %123 {offsets = [0, 2, 0], sizes = [4, 8, 64], strides = [1, 1, 1]} : vector<4x10x64xf32> to vector<4x8x64xf32>
      %137 = vector.extract_strided_slice %30 {offsets = [5, 0], sizes = [1, 64], strides = [1, 1]} : vector<9x64xf32> to vector<1x64xf32>
      %138 = vector.shape_cast %137 : vector<1x64xf32> to vector<1x1x64xf32>
      %139 = vector.broadcast %138 : vector<1x1x64xf32> to vector<4x8x64xf32>
      %140 = arith.mulf %136, %139 : vector<4x8x64xf32>
      %141 = arith.addf %135, %140 : vector<4x8x64xf32>
      %c2_i32_84 = arith.constant 2 : i32
      %142 = arith.addi %37, %c2_i32_84 : i32
      %143 = arith.index_cast %142 : i32 to index
      %c0_85 = arith.constant 0 : index
      %c0_86 = arith.constant 0 : index
      %144 = vector.load %arg12[%143, %c0_85, %c0_86] : memref<10x10x64xf32, #tpu.memory_space<vmem>>, vector<4x10x64xf32>
      %145 = vector.extract_strided_slice %144 {offsets = [0, 0, 0], sizes = [4, 8, 64], strides = [1, 1, 1]} : vector<4x10x64xf32> to vector<4x8x64xf32>
      %146 = vector.extract_strided_slice %30 {offsets = [6, 0], sizes = [1, 64], strides = [1, 1]} : vector<9x64xf32> to vector<1x64xf32>
      %147 = vector.shape_cast %146 : vector<1x64xf32> to vector<1x1x64xf32>
      %148 = vector.broadcast %147 : vector<1x1x64xf32> to vector<4x8x64xf32>
      %149 = arith.mulf %145, %148 : vector<4x8x64xf32>
      %150 = arith.addf %141, %149 : vector<4x8x64xf32>
      %151 = vector.extract_strided_slice %144 {offsets = [0, 1, 0], sizes = [4, 8, 64], strides = [1, 1, 1]} : vector<4x10x64xf32> to vector<4x8x64xf32>
      %152 = vector.extract_strided_slice %30 {offsets = [7, 0], sizes = [1, 64], strides = [1, 1]} : vector<9x64xf32> to vector<1x64xf32>
      %153 = vector.shape_cast %152 : vector<1x64xf32> to vector<1x1x64xf32>
      %154 = vector.broadcast %153 : vector<1x1x64xf32> to vector<4x8x64xf32>
      %155 = arith.mulf %151, %154 : vector<4x8x64xf32>
      %156 = arith.addf %150, %155 : vector<4x8x64xf32>
      %157 = vector.extract_strided_slice %144 {offsets = [0, 2, 0], sizes = [4, 8, 64], strides = [1, 1, 1]} : vector<4x10x64xf32> to vector<4x8x64xf32>
      %158 = vector.extract_strided_slice %30 {offsets = [8, 0], sizes = [1, 64], strides = [1, 1]} : vector<9x64xf32> to vector<1x64xf32>
      %159 = vector.shape_cast %158 : vector<1x64xf32> to vector<1x1x64xf32>
      %160 = vector.broadcast %159 : vector<1x1x64xf32> to vector<4x8x64xf32>
      %161 = arith.mulf %157, %160 : vector<4x8x64xf32>
      %162 = arith.addf %156, %161 : vector<4x8x64xf32>
      %163 = vector.broadcast %33 : vector<1x1x64xf32> to vector<4x8x64xf32>
      %164 = arith.addf %162, %163 : vector<4x8x64xf32>
      %cst_87 = arith.constant 0.000000e+00 : f32
      %165 = vector.broadcast %cst_87 : f32 to vector<4x8x64xf32>
      %166 = arith.maximumf %164, %165 : vector<4x8x64xf32>
      %167 = vector.shape_cast %166 : vector<4x8x64xf32> to vector<32x64xf32>
      %cst_88 = arith.constant dense<0.000000e+00> : vector<32x32xf32>
      %168 = tpu.matmul %167, %34, %cst_88 {dimension_numbers = #tpu.dot_dimension_numbers<[1], [0], [0], [1], [0, 0, 1, 1], [], []>} : vector<32x64xf32>, vector<64x32xf32>, vector<32x32xf32> -> vector<32x32xf32>
      %169 = vector.broadcast %35 : vector<1x32xf32> to vector<32x32xf32>
      %170 = arith.addf %168, %169 : vector<32x32xf32>
      %171 = arith.negf %170 : vector<32x32xf32>
      %172 = math.exp %171 : vector<32x32xf32>
      %cst_89 = arith.constant 1.000000e+00 : f32
      %173 = vector.broadcast %cst_89 : f32 to vector<32x32xf32>
      %174 = arith.addf %173, %172 : vector<32x32xf32>
      %175 = arith.divf %173, %174 : vector<32x32xf32>
      %176 = vector.shape_cast %175 : vector<32x32xf32> to vector<4x8x32xf32>
      %c0_90 = arith.constant 0 : index
      %177 = arith.index_cast %37 : i32 to index
      %c0_91 = arith.constant 0 : index
      %c0_92 = arith.constant 0 : index
      %178 = vector.load %arg9[%c0_90, %177, %c0_91, %c0_92] : memref<1x8x8x32xf32, #tpu.memory_space<vmem>>, vector<1x4x8x32xf32>
      %179 = vector.shape_cast %178 : vector<1x4x8x32xf32> to vector<4x8x32xf32>
      %180 = vector.shape_cast %176 : vector<4x8x32xf32> to vector<1x4x8x32xf32>
      tpu.vector_store %arg9[%c0_90, %177, %c0_91, %c0_92], %180 {strides = array<i32>} : memref<1x8x8x32xf32, #tpu.memory_space<vmem>>, vector<1x4x8x32xf32>,
    }
    %c2_i32_68 = arith.constant 2 : i32
    return
  }
  func.func @transform_0(%arg0: i32) -> (i32, i32, i32, i32) {
    %c0_i32 = arith.constant 0 : i32
    %c0_i32_0 = arith.constant 0 : i32
    %c0_i32_1 = arith.constant 0 : i32
    %c0_i32_2 = arith.constant 0 : i32
    return %arg0, %c0_i32, %c0_i32_0, %c0_i32_1 : i32, i32, i32, i32
  }
  func.func @transform_1(%arg0: i32) -> (i32, i32) {
    %c0_i32 = arith.constant 0 : i32
    %c0_i32_0 = arith.constant 0 : i32
    %c0_i32_1 = arith.constant 0 : i32
    return %c0_i32, %c0_i32_0 : i32, i32
  }
  func.func @transform_2(%arg0: i32) -> (i32, i32) {
    %c0_i32 = arith.constant 0 : i32
    %c0_i32_0 = arith.constant 0 : i32
    %c0_i32_1 = arith.constant 0 : i32
    return %c0_i32, %c0_i32_0 : i32, i32
  }
  func.func @transform_3(%arg0: i32) -> (i32, i32) {
    %c0_i32 = arith.constant 0 : i32
    %c0_i32_0 = arith.constant 0 : i32
    %c0_i32_1 = arith.constant 0 : i32
    return %c0_i32, %c0_i32_0 : i32, i32
  }
  func.func @transform_4(%arg0: i32) -> (i32, i32) {
    %c0_i32 = arith.constant 0 : i32
    %c0_i32_0 = arith.constant 0 : i32
    %c0_i32_1 = arith.constant 0 : i32
    return %c0_i32, %c0_i32_0 : i32, i32
  }
  func.func @transform_5(%arg0: i32) -> (i32, i32) {
    %c0_i32 = arith.constant 0 : i32
    %c0_i32_0 = arith.constant 0 : i32
    %c0_i32_1 = arith.constant 0 : i32
    return %c0_i32, %c0_i32_0 : i32, i32
  }
  func.func @transform_6(%arg0: i32) -> (i32, i32) {
    %c0_i32 = arith.constant 0 : i32
    %c0_i32_0 = arith.constant 0 : i32
    %c0_i32_1 = arith.constant 0 : i32
    return %c0_i32, %c0_i32_0 : i32, i32
  }
  func.func @transform_7(%arg0: i32) -> (i32, i32) {
    %c0_i32 = arith.constant 0 : i32
    %c0_i32_0 = arith.constant 0 : i32
    %c0_i32_1 = arith.constant 0 : i32
    return %c0_i32, %c0_i32_0 : i32, i32
  }
  func.func @transform_8(%arg0: i32) -> (i32, i32, i32, i32) {
    %c0_i32 = arith.constant 0 : i32
    %c0_i32_0 = arith.constant 0 : i32
    %c0_i32_1 = arith.constant 0 : i32
    %c0_i32_2 = arith.constant 0 : i32
    return %arg0, %c0_i32, %c0_i32_0, %c0_i32_1 : i32, i32, i32, i32
  }
}

</mosaic_0001>

<llo_original>
// kernel: tpu_custom_call.1
$region0: #{tpu_custom_call.1}
  #allocation0 [shape = 'u32[]', space=smem, size = 0x4, offset = 0x4, fixed_abs, tag = 'smem constant byte address 0x4 - core index']
  #allocation1 [shape = 'u32[144,128]{1,0:T(1,128)}', space=vmem, size = 0x12000, scoped, tag = 'internal scratch']
  #allocation2 [shape = 'f32[6,6,64]{2,1,0:T(8,128)}', space=vmem, size = 0x6000, scoped, tag = 'scratch operand']
  #allocation3 [shape = 'f32[10,10,64]{2,1,0:T(8,128)}', space=vmem, size = 0x14000, scoped, tag = 'scratch operand']
  #allocation4 [shape = 'f32[10,10,64]{2,1,0:T(8,128)}', space=vmem, size = 0x14000, scoped, tag = 'scratch operand']
  %s0 = inlined_call_operand.vmem [shape: f32[2,4,4,64], index: 0, kind: input, shape index: {}]
  %s1 = inlined_call_operand.vmem [shape: f32[16,64], index: 1, kind: input, shape index: {}]
  %s2 = inlined_call_operand.vmem [shape: f32[16,64], index: 2, kind: input, shape index: {}]
  %s3 = inlined_call_operand.vmem [shape: f32[9,64], index: 3, kind: input, shape index: {}]
  %s4 = inlined_call_operand.vmem [shape: f32[9,64], index: 4, kind: input, shape index: {}]
  %s5 = inlined_call_operand.vmem [shape: f32[1,64], index: 5, kind: input, shape index: {}]
  %s6 = inlined_call_operand.vmem [shape: f32[64,32], index: 6, kind: input, shape index: {}]
  %s7 = inlined_call_operand.vmem [shape: f32[1,32], index: 7, kind: input, shape index: {}]
  %s8 = inlined_call_operand.hbm [shape: f32[2,8,8,32], index: 8, kind: output, shape index: {}]
  %s9 = sld [smem:[#allocation0]]
  $region79: #{tpu_custom_call.1} parent=0
    _
  %s11 = ssub.s32 1, %s9
  %s12 = scalar_select 0, %s11, %s9
  $region1: #{tpu_custom_call.1} parent=0
    #allocation5 [shape = 'u8[65536]{0}', space=vmem, size = 0x10000, scoped, tag = 'output window, operand 0']
    #allocation6 [shape = 's32[2]{0}', space=sflag, size = 0x8, scoped, tag = 'scoped memory for tpu_custom_call.1']
    %13 = vsyncpa [#allocation6], 0
    %s14 = scalar_lea.sflag [#allocation6], 1
    %15 = vsyncpa %s14, 0
    loop: start=0, step=1, limit=4
    $region2: #{tpu_custom_call.1} parent=1 // loop_pre_header
      _
    $region3: #{tpu_custom_call.1} parent=1 // loop_header
      %s17 = sphi 0, %s21
      %p18 = scmp.ge.s32.totalorder %s17, 4
      %s27 = sphi 0, %s29
      %s30 = sphi 0, %s27
      %s31 = sphi 0, %s30
      %s47 = sphi 0, %s31
      %s51 = sphi 0, %s51
      %s53 = sphi 0, %s51
      %s54 = sphi 0, %s53
      %s68 = sphi 0, %s54
      %s72 = sphi 0, %s72
      %s74 = sphi 0, %s72
      %s75 = sphi 0, %s74
      %s89 = sphi 0, %s75
      %s93 = sphi 0, %s93
      %s95 = sphi 0, %s93
      %s96 = sphi 0, %s95
      %s110 = sphi 0, %s96
      %s114 = sphi 0, %s114
      %s116 = sphi 0, %s114
      %s117 = sphi 0, %s116
      %s131 = sphi 0, %s117
      %s135 = sphi 0, %s135
      %s137 = sphi 0, %s135
      %s138 = sphi 0, %s137
      %s152 = sphi 0, %s138
      %s156 = sphi 0, %s156
      %s158 = sphi 0, %s156
      %s159 = sphi 0, %s158
      %s173 = sphi 0, %s159
      %s177 = sphi 0, %s177
      %s179 = sphi 0, %s177
      %s180 = sphi 0, %s179
      %s194 = sphi 0, %s180
      %s200 = sphi 0, %s202
      %s203 = sphi 0, %s200
      %s204 = sphi 0, %s203
      %s220 = sphi 0, %s204
    $region4: #{tpu_custom_call.1} parent=1 // loop_header_branch
      %20 = sbr.rel (%p18) target = $region8
    $region5: #{tpu_custom_call.1} parent=1 // loop_body
      %s22 = ssub.s32 %s17, 1
      %s23 = ssub.s32 %s17, 2
      %s24 = sadd.s32 %s17, 1
      %s25 = ssub.s32 %s17, %s24
      %p26 = scmp.eq.s32.totalorder %s25, 0
      %s28 = sadd.s32 %s27, 1
      %s29 = scalar_select %p26, %s27, %s28
      %p32 = pneg %p26
      %p33 = scmp.eq.s32.totalorder %s17, 1
      %p34 = por %p32, %p33
      %p35 = scmp.ne.s32.totalorder %s27, %s30
      %p36 = scmp.eq.s32.totalorder %s17, 0
      %p37 = por %p35, %p36
      %p38 = scmp.ne.s32.totalorder %s27, %s30
      %p39 = scmp.eq.s32.totalorder %s22, 1
      %p40 = por %p38, %p39
      %p41 = scmp.ne.s32.totalorder %s30, %s31
      %p42 = scmp.eq.s32.totalorder %s22, 0
      %p43 = por %p41, %p42
      %p44 = scmp.ne.s32.totalorder %s30, %s31
      %p45 = scmp.eq.s32.totalorder %s23, 1
      %p46 = por %p44, %p45
      %p48 = scmp.ne.s32.totalorder %s31, %s47
      %p49 = scmp.eq.s32.totalorder %s23, 0
      %p50 = por %p48, %p49
      %s52 = sadd.s32 %s51, 1
      %p55 = scmp.eq.s32.totalorder %s17, 1
      %p56 = scmp.ne.s32.totalorder %s51, %s53
      %p57 = scmp.eq.s32.totalorder %s17, 0
      %p58 = por %p56, %p57
      %p59 = scmp.ne.s32.totalorder %s51, %s53
      %p60 = scmp.eq.s32.totalorder %s22, 1
      %p61 = por %p59, %p60
      %p62 = scmp.ne.s32.totalorder %s53, %s54
      %p63 = scmp.eq.s32.totalorder %s22, 0
      %p64 = por %p62, %p63
      %p65 = scmp.ne.s32.totalorder %s53, %s54
      %p66 = scmp.eq.s32.totalorder %s23, 1
      %p67 = por %p65, %p66
      %p69 = scmp.ne.s32.totalorder %s54, %s68
      %p70 = scmp.eq.s32.totalorder %s23, 0
      %p71 = por %p69, %p70
      %s73 = sadd.s32 %s72, 1
      %p76 = scmp.eq.s32.totalorder %s17, 1
      %p77 = scmp.ne.s32.totalorder %s72, %s74
      %p78 = scmp.eq.s32.totalorder %s17, 0
      %p79 = por %p77, %p78
      %p80 = scmp.ne.s32.totalorder %s72, %s74
      %p81 = scmp.eq.s32.totalorder %s22, 1
      %p82 = por %p80, %p81
      %p83 = scmp.ne.s32.totalorder %s74, %s75
      %p84 = scmp.eq.s32.totalorder %s22, 0
      %p85 = por %p83, %p84
      %p86 = scmp.ne.s32.totalorder %s74, %s75
      %p87 = scmp.eq.s32.totalorder %s23, 1
      %p88 = por %p86, %p87
      %p90 = scmp.ne.s32.totalorder %s75, %s89
      %p91 = scmp.eq.s32.totalorder %s23, 0
      %p92 = por %p90, %p91
      %s94 = sadd.s32 %s93, 1
      %p97 = scmp.eq.s32.totalorder %s17, 1
      %p98 = scmp.ne.s32.totalorder %s93, %s95
      %p99 = scmp.eq.s32.totalorder %s17, 0
      %p100 = por %p98, %p99
      %p101 = scmp.ne.s32.totalorder %s93, %s95
      %p102 = scmp.eq.s32.totalorder %s22, 1
      %p103 = por %p101, %p102
      %p104 = scmp.ne.s32.totalorder %s95, %s96
      %p105 = scmp.eq.s32.totalorder %s22, 0
      %p106 = por %p104, %p105
      %p107 = scmp.ne.s32.totalorder %s95, %s96
      %p108 = scmp.eq.s32.totalorder %s23, 1
      %p109 = por %p107, %p108
      %p111 = scmp.ne.s32.totalorder %s96, %s110
      %p112 = scmp.eq.s32.totalorder %s23, 0
      %p113 = por %p111, %p112
      %s115 = sadd.s32 %s114, 1
      %p118 = scmp.eq.s32.totalorder %s17, 1
      %p119 = scmp.ne.s32.totalorder %s114, %s116
      %p120 = scmp.eq.s32.totalorder %s17, 0
      %p121 = por %p119, %p120
      %p122 = scmp.ne.s32.totalorder %s114, %s116
      %p123 = scmp.eq.s32.totalorder %s22, 1
      %p124 = por %p122, %p123
      %p125 = scmp.ne.s32.totalorder %s116, %s117
      %p126 = scmp.eq.s32.totalorder %s22, 0
      %p127 = por %p125, %p126
      %p128 = scmp.ne.s32.totalorder %s116, %s117
      %p129 = scmp.eq.s32.totalorder %s23, 1
      %p130 = por %p128, %p129
      %p132 = scmp.ne.s32.totalorder %s117, %s131
      %p133 = scmp.eq.s32.totalorder %s23, 0
      %p134 = por %p132, %p133
      %s136 = sadd.s32 %s135, 1
      %p139 = scmp.eq.s32.totalorder %s17, 1
      %p140 = scmp.ne.s32.totalorder %s135, %s137
      %p141 = scmp.eq.s32.totalorder %s17, 0
      %p142 = por %p140, %p141
      %p143 = scmp.ne.s32.totalorder %s135, %s137
      %p144 = scmp.eq.s32.totalorder %s22, 1
      %p145 = por %p143, %p144
      %p146 = scmp.ne.s32.totalorder %s137, %s138
      %p147 = scmp.eq.s32.totalorder %s22, 0
      %p148 = por %p146, %p147
      %p149 = scmp.ne.s32.totalorder %s137, %s138
      %p150 = scmp.eq.s32.totalorder %s23, 1
      %p151 = por %p149, %p150
      %p153 = scmp.ne.s32.totalorder %s138, %s152
      %p154 = scmp.eq.s32.totalorder %s23, 0
      %p155 = por %p153, %p154
      %s157 = sadd.s32 %s156, 1
      %p160 = scmp.eq.s32.totalorder %s17, 1
      %p161 = scmp.ne.s32.totalorder %s156, %s158
      %p162 = scmp.eq.s32.totalorder %s17, 0
      %p163 = por %p161, %p162
      %p164 = scmp.ne.s32.totalorder %s156, %s158
      %p165 = scmp.eq.s32.totalorder %s22, 1
      %p166 = por %p164, %p165
      %p167 = scmp.ne.s32.totalorder %s158, %s159
      %p168 = scmp.eq.s32.totalorder %s22, 0
      %p169 = por %p167, %p168
      %p170 = scmp.ne.s32.totalorder %s158, %s159
      %p171 = scmp.eq.s32.totalorder %s23, 1
      %p172 = por %p170, %p171
      %p174 = scmp.ne.s32.totalorder %s159, %s173
      %p175 = scmp.eq.s32.totalorder %s23, 0
      %p176 = por %p174, %p175
      %s178 = sadd.s32 %s177, 1
      %p181 = scmp.eq.s32.totalorder %s17, 1
      %p182 = scmp.ne.s32.totalorder %s177, %s179
      %p183 = scmp.eq.s32.totalorder %s17, 0
      %p184 = por %p182, %p183
      %p185 = scmp.ne.s32.totalorder %s177, %s179
      %p186 = scmp.eq.s32.totalorder %s22, 1
      %p187 = por %p185, %p186
      %p188 = scmp.ne.s32.totalorder %s179, %s180
      %p189 = scmp.eq.s32.totalorder %s22, 0
      %p190 = por %p188, %p189
      %p191 = scmp.ne.s32.totalorder %s179, %s180
      %p192 = scmp.eq.s32.totalorder %s23, 1
      %p193 = por %p191, %p192
      %p195 = scmp.ne.s32.totalorder %s180, %s194
      %p196 = scmp.eq.s32.totalorder %s23, 0
      %p197 = por %p195, %p196
      %s198 = ssub.s32 %s17, %s24
      %p199 = scmp.eq.s32.totalorder %s198, 0
      %s201 = sadd.s32 %s200, 1
      %s202 = scalar_select %p199, %s200, %s201
      %p205 = pneg %p199
      %p206 = scmp.eq.s32.totalorder %s17, 1
      %p207 = por %p205, %p206
      %p208 = scmp.ne.s32.totalorder %s200, %s203
      %p209 = scmp.eq.s32.totalorder %s17, 0
      %p210 = por %p208, %p209
      %p211 = scmp.ne.s32.totalorder %s200, %s203
      %p212 = scmp.eq.s32.totalorder %s22, 1
      %p213 = por %p211, %p212
      %p214 = scmp.ne.s32.totalorder %s203, %s204
      %p215 = scmp.eq.s32.totalorder %s22, 0
      %p216 = por %p214, %p215
      %p217 = scmp.ne.s32.totalorder %s203, %s204
      %p218 = scmp.eq.s32.totalorder %s23, 1
      %p219 = por %p217, %p218
      %p221 = scmp.ne.s32.totalorder %s204, %s220
      %p222 = scmp.eq.s32.totalorder %s23, 0
      %p223 = por %p221, %p222
      %p224 = scmp.le.s32.totalorder 1, %s17
      %p225 = scmp.lt.s32.totalorder %s17, 3
      %p226 = pnand %p224, %p225
      %p227 = pneg %p226
      // Predicated region
      $region9: #{tpu_custom_call.1} parent=5 // pred_check
        _
      $region10: #{tpu_custom_call.1} parent=5 // pred_check_branch
        %229 = sbr.rel (%p226) target = $region12
      $region11: #{tpu_custom_call.1} parent=5 // pred_region
        %s230 = ssub.s32 %s17, 1
        // Predicated region
        $region13: #{tpu_custom_call.1} parent=11 // pred_check
          %p231 = pneg %p64
        $region14: #{tpu_custom_call.1} parent=11 // pred_check_branch
          %233 = sbr.rel (%p231) target = $region16
        $region15: #{tpu_custom_call.1} parent=11 // pred_region
          _
        $region16: #{tpu_custom_call.1} parent=11 // pred_fallthru
          _
        // Predicated region
        $region17: #{tpu_custom_call.1} parent=11 // pred_check
          %p234 = pneg %p85
        $region18: #{tpu_custom_call.1} parent=11 // pred_check_branch
          %236 = sbr.rel (%p234) target = $region20
        $region19: #{tpu_custom_call.1} parent=11 // pred_region
          _
        $region20: #{tpu_custom_call.1} parent=11 // pred_fallthru
          _
        // Predicated region
        $region21: #{tpu_custom_call.1} parent=11 // pred_check
          %p237 = pneg %p106
        $region22: #{tpu_custom_call.1} parent=11 // pred_check_branch
          %239 = sbr.rel (%p237) target = $region24
        $region23: #{tpu_custom_call.1} parent=11 // pred_region
          _
        $region24: #{tpu_custom_call.1} parent=11 // pred_fallthru
          _
        // Predicated region
        $region25: #{tpu_custom_call.1} parent=11 // pred_check
          %p240 = pneg %p127
        $region26: #{tpu_custom_call.1} parent=11 // pred_check_branch
          %242 = sbr.rel (%p240) target = $region28
        $region27: #{tpu_custom_call.1} parent=11 // pred_region
          _
        $region28: #{tpu_custom_call.1} parent=11 // pred_fallthru
          _
        // Predicated region
        $region29: #{tpu_custom_call.1} parent=11 // pred_check
          %p243 = pneg %p148
        $region30: #{tpu_custom_call.1} parent=11 // pred_check_branch
          %245 = sbr.rel (%p243) target = $region32
        $region31: #{tpu_custom_call.1} parent=11 // pred_region
          _
        $region32: #{tpu_custom_call.1} parent=11 // pred_fallthru
          _
        // Predicated region
        $region33: #{tpu_custom_call.1} parent=11 // pred_check
          %p246 = pneg %p169
        $region34: #{tpu_custom_call.1} parent=11 // pred_check_branch
          %248 = sbr.rel (%p246) target = $region36
        $region35: #{tpu_custom_call.1} parent=11 // pred_region
          _
        $region36: #{tpu_custom_call.1} parent=11 // pred_fallthru
          _
        // Predicated region
        $region37: #{tpu_custom_call.1} parent=11 // pred_check
          %p249 = pneg %p190
        $region38: #{tpu_custom_call.1} parent=11 // pred_check_branch
          %251 = sbr.rel (%p249) target = $region40
        $region39: #{tpu_custom_call.1} parent=11 // pred_region
          _
        $region40: #{tpu_custom_call.1} parent=11 // pred_fallthru
          _
      $region12: #{tpu_custom_call.1} parent=5 // pred_fallthru
        _
      %p252 = scmp.lt.s32.totalorder %s17, 2
      // Predicated region
      $region41: #{tpu_custom_call.1} parent=5 // pred_check
        %p253 = pneg %p252
      $region42: #{tpu_custom_call.1} parent=5 // pred_check_branch
        %255 = sbr.rel (%p253) target = $region44
      $region43: #{tpu_custom_call.1} parent=5 // pred_region
        // Predicated region
        $region45: #{tpu_custom_call.1} parent=43 // pred_check
          %p256 = pneg %p37
        $region46: #{tpu_custom_call.1} parent=43 // pred_check_branch
          %258 = sbr.rel (%p256) target = $region48
        $region47: #{tpu_custom_call.1} parent=43 // pred_region
          %p259 = scmp.lt.s32.totalorder %s17, 1
          %s260 = scalar_select %p259, %s17, 1
          %s261 = smul.addr %s260, 4
          %s262 = smul.addr %s261, 4
          %s263 = scalar_lea.vmem %s0, %s262
        $region48: #{tpu_custom_call.1} parent=43 // pred_fallthru
          _
      $region44: #{tpu_custom_call.1} parent=5 // pred_fallthru
        _
      %p264 = scmp.le.s32.totalorder 1, %s17
      %p265 = scmp.lt.s32.totalorder %s17, 3
      %p266 = pnand %p264, %p265
      %p267 = pneg %p266
      // Predicated region
      $region49: #{tpu_custom_call.1} parent=5 // pred_check
        _
      $region50: #{tpu_custom_call.1} parent=5 // pred_check_branch
        %269 = sbr.rel (%p266) target = $region52
      $region51: #{tpu_custom_call.1} parent=5 // pred_region
        %s270 = ssub.s32 %s17, 1
        %p271 = scmp.lt.s32.totalorder %s22, 1
        %s272 = scalar_select %p271, %s22, 1
        %s273 = smul.addr %s272, 4
        %s274 = smul.addr %s273, 4
        %s275 = scalar_lea.vmem %s0, %s274
        %p276 = pneg %p43
        %p277 = pneg %p40
        %p278 = pneg %p64
        %p279 = pneg %p61
        %p280 = pneg %p85
        %p281 = pneg %p82
        %p282 = pneg %p106
        %p283 = pneg %p103
        %p284 = pneg %p127
        %p285 = pneg %p124
        %p286 = pneg %p148
        %p287 = pneg %p145
        %p288 = pneg %p169
        %p289 = pneg %p166
        %p290 = pneg %p190
        %p291 = pneg %p187
        %p292 = pneg %p216
        %p293 = pneg %p213
        %s294 = sand.u32 %s203, 1
        %s295 = scalar_lea.sflag [#allocation6], %s294
        %s296 = sand.u32 %s203, 1
        %s297 = smul.addr %s296, 64
        %s298 = scalar_lea.vmem [#allocation5], %s297
        %p299 = scmp.lt.s32.totalorder %s22, 1
        %s300 = scalar_select %p299, %s22, 1
        %s301 = smul.addr %s300, 4
        %s302 = smul.addr %s301, 4
        %s303 = scalar_lea.vmem %s0, %s302
        %vm304 = vcmask 521216
        %305 = vst.msk [vmem:[#allocation2] sm:$0x3f] %vm304, 0.0
        %s306 = scalar_lea.vmem [#allocation2], 40
        %307 = vst.msk [vmem:[%s306] sm:$0x3f] %vm304, 0.0
        %vm308 = vcmask 516096
        %309 = vst.msk [vmem:[#allocation2] sm:$0x1] %vm308, 0.0
        %310 = vst.msk [vmem:[#allocation2 + $0x8] sm:$0x1] %vm308, 0.0
        %311 = vst.msk [vmem:[#allocation2 + $0x10] sm:$0x1] %vm308, 0.0
        %312 = vst.msk [vmem:[#allocation2 + $0x18] sm:$0x1] %vm308, 0.0
        %313 = vst.msk [vmem:[#allocation2 + $0x20] sm:$0x1] %vm308, 0.0
        %314 = vst.msk [vmem:[#allocation2 + $0x28] sm:$0x1] %vm308, 0.0
        %315 = vst.msk [vmem:[#allocation2 + $0x5] sm:$0x1] %vm308, 0.0
        %316 = vst.msk [vmem:[#allocation2 + $0xd] sm:$0x1] %vm308, 0.0
        %317 = vst.msk [vmem:[#allocation2 + $0x15] sm:$0x1] %vm308, 0.0
        %318 = vst.msk [vmem:[#allocation2 + $0x1d] sm:$0x1] %vm308, 0.0
        %319 = vst.msk [vmem:[#allocation2 + $0x25] sm:$0x1] %vm308, 0.0
        %320 = vst.msk [vmem:[#allocation2 + $0x2d] sm:$0x1] %vm308, 0.0
        %vm321 = vcmask 523264
        %322 = vst.msk [vmem:[#allocation3] sm:$0xff] %vm321, 0.0
        %vm323 = vcmask 517120
        %324 = vst.msk [vmem:[#allocation3 + $0x8] sm:$0x3] %vm323, 0.0
        %s325 = scalar_lea.vmem [#allocation3], 144
        %326 = vst.msk [vmem:[%s325] sm:$0xff] %vm321, 0.0
        %327 = vst.msk [vmem:[%s325 + $0x8] sm:$0x3] %vm323, 0.0
        %328 = vst.msk [vmem:[#allocation3] sm:$0x1] %vm308, 0.0
        %329 = vst.msk [vmem:[#allocation3 + $0x10] sm:$0x1] %vm308, 0.0
        %330 = vst.msk [vmem:[#allocation3 + $0x20] sm:$0x1] %vm308, 0.0
        %331 = vst.msk [vmem:[#allocation3 + $0x30] sm:$0x1] %vm308, 0.0
        %332 = vst.msk [vmem:[#allocation3 + $0x40] sm:$0x1] %vm308, 0.0
        %333 = vst.msk [vmem:[#allocation3 + $0x50] sm:$0x1] %vm308, 0.0
        %334 = vst.msk [vmem:[#allocation3 + $0x60] sm:$0x1] %vm308, 0.0
        %335 = vst.msk [vmem:[#allocation3 + $0x70] sm:$0x1] %vm308, 0.0
        %336 = vst.msk [vmem:[#allocation3 + $0x80] sm:$0x1] %vm308, 0.0
        %337 = vst.msk [vmem:[#allocation3 + $0x90] sm:$0x1] %vm308, 0.0
        %338 = vst.msk [vmem:[#allocation3 + $0x9] sm:$0x1] %vm308, 0.0
        %339 = vst.msk [vmem:[#allocation3 + $0x19] sm:$0x1] %vm308, 0.0
        %340 = vst.msk [vmem:[#allocation3 + $0x29] sm:$0x1] %vm308, 0.0
        %341 = vst.msk [vmem:[#allocation3 + $0x39] sm:$0x1] %vm308, 0.0
        %342 = vst.msk [vmem:[#allocation3 + $0x49] sm:$0x1] %vm308, 0.0
        %343 = vst.msk [vmem:[#allocation3 + $0x59] sm:$0x1] %vm308, 0.0
        %344 = vst.msk [vmem:[#allocation3 + $0x69] sm:$0x1] %vm308, 0.0
        %345 = vst.msk [vmem:[#allocation3 + $0x79] sm:$0x1] %vm308, 0.0
        %346 = vst.msk [vmem:[#allocation3 + $0x89] sm:$0x1] %vm308, 0.0
        %347 = vst.msk [vmem:[#allocation3 + $0x99] sm:$0x1] %vm308, 0.0
        %348 = vst.msk [vmem:[#allocation4] sm:$0xff] %vm321, 0.0
        %349 = vst.msk [vmem:[#allocation4 + $0x8] sm:$0x3] %vm323, 0.0
        %s350 = scalar_lea.vmem [#allocation4], 144
        %351 = vst.msk [vmem:[%s350] sm:$0xff] %vm321, 0.0
        %352 = vst.msk [vmem:[%s350 + $0x8] sm:$0x3] %vm323, 0.0
        %353 = vst.msk [vmem:[#allocation4] sm:$0x1] %vm308, 0.0
        %354 = vst.msk [vmem:[#allocation4 + $0x10] sm:$0x1] %vm308, 0.0
        %355 = vst.msk [vmem:[#allocation4 + $0x20] sm:$0x1] %vm308, 0.0
        %356 = vst.msk [vmem:[#allocation4 + $0x30] sm:$0x1] %vm308, 0.0
        %357 = vst.msk [vmem:[#allocation4 + $0x40] sm:$0x1] %vm308, 0.0
        %358 = vst.msk [vmem:[#allocation4 + $0x50] sm:$0x1] %vm308, 0.0
        %359 = vst.msk [vmem:[#allocation4 + $0x60] sm:$0x1] %vm308, 0.0
        %360 = vst.msk [vmem:[#allocation4 + $0x70] sm:$0x1] %vm308, 0.0
        %361 = vst.msk [vmem:[#allocation4 + $0x80] sm:$0x1] %vm308, 0.0
        %362 = vst.msk [vmem:[#allocation4 + $0x90] sm:$0x1] %vm308, 0.0
        %363 = vst.msk [vmem:[#allocation4 + $0x9] sm:$0x1] %vm308, 0.0
        %364 = vst.msk [vmem:[#allocation4 + $0x19] sm:$0x1] %vm308, 0.0
        %365 = vst.msk [vmem:[#allocation4 + $0x29] sm:$0x1] %vm308, 0.0
        %366 = vst.msk [vmem:[#allocation4 + $0x39] sm:$0x1] %vm308, 0.0
        %367 = vst.msk [vmem:[#allocation4 + $0x49] sm:$0x1] %vm308, 0.0
        %368 = vst.msk [vmem:[#allocation4 + $0x59] sm:$0x1] %vm308, 0.0
        %369 = vst.msk [vmem:[#allocation4 + $0x69] sm:$0x1] %vm308, 0.0
        %370 = vst.msk [vmem:[#allocation4 + $0x79] sm:$0x1] %vm308, 0.0
        %371 = vst.msk [vmem:[#allocation4 + $0x89] sm:$0x1] %vm308, 0.0
        %372 = vst.msk [vmem:[#allocation4 + $0x99] sm:$0x1] %vm308, 0.0
        %v373 = vld [vmem:[%s303] sm:$0xf]
        %v374 = vld [vmem:[%s303 + $0x4] sm:$0xf]
        %v375 = vld [vmem:[%s303 + $0x8] sm:$0xf]
        %v376 = vld [vmem:[%s303 + $0xc] sm:$0xf]
        %s377 = scalar_lea.vmem [#allocation2], 8
        %vm378 = vcmask 519168
        %379 = vst.msk [vmem:[%s377 + $0x1] sm:$0xf] %vm378, %v373
        %380 = vst.msk [vmem:[%s377 + $0x9] sm:$0xf] %vm378, %v374
        %381 = vst.msk [vmem:[%s377 + $0x11] sm:$0xf] %vm378, %v375
        %382 = vst.msk [vmem:[%s377 + $0x19] sm:$0xf] %vm378, %v376
        %v383 = vld [vmem:[%s1] sm:$0xff]
        %v384 = vld [vmem:[%s1 + $0x8] sm:$0xff]
        %v385 = vld [vmem:[%s2] sm:$0xff]
        %v386 = vld [vmem:[%s2 + $0x8] sm:$0xff]
        %v387 = vld [vmem:[%s3] sm:$0xff]
        %v388 = vld [vmem:[%s3 + $0x8] sm:$0x1]
        %v389 = vld [vmem:[%s4] sm:$0xff]
        %v390 = vld [vmem:[%s4 + $0x8] sm:$0x1]
        loop: start=0, step=1, limit=2
        $region53: #{tpu_custom_call.1} parent=51 // loop_pre_header
          _
        $region54: #{tpu_custom_call.1} parent=51 // loop_header
          %s392 = sphi 0, %s396
          %p393 = scmp.ge.s32.totalorder %s392, 2
        $region55: #{tpu_custom_call.1} parent=51 // loop_header_branch
          %395 = sbr.rel (%p393) target = $region59
        $region56: #{tpu_custom_call.1} parent=51 // loop_body
          %s397 = smul.u32 %s392, 2
          %s398 = smul.u32 %s397, 8
          %s399 = scalar_lea.vmem [#allocation2], %s398
          %v400 = vld [vmem:[%s399] sm:$0x3f]
          %v401 = vld [vmem:[%s399 + $0x8] sm:$0x3f]
          %v402 = vld [vmem:[%s399 + $0x10] sm:$0x3f]
          %v403 = vld [vmem:[%s399 + $0x18] sm:$0x3f]
          %v404 = vlaneseq
          %v405 = vshrl.u32 %v404, 7
          %v406 = vsub.s32 0, %v405
          %v407 = vrot.slane %v383, %v406
          %v408 = vmul.f32 %v400, %v407
          %v409 = vmul.f32 %v401, %v407
          %v410 = vlaneseq
          %v411 = vshrl.u32 %v410, 7
          %v412 = vsub.s32 1, %v411
          %v413 = vrot.slane %v383, %v412
          %v414 = vmul.f32 %v400, %v413
          %v415 = vmul.f32 %v401, %v413
          %v418 = vrot.slane %v414, 1
          %v419 = vrot.slane %v415, 1
          %v422 = vadd.f32 %v408, %v418
          %v423 = vadd.f32 %v409, %v419
          %v424 = vlaneseq
          %v425 = vshrl.u32 %v424, 7
          %v426 = vsub.s32 2, %v425
          %v427 = vrot.slane %v383, %v426
          %v428 = vmul.f32 %v401, %v427
          %v429 = vmul.f32 %v402, %v427
          %v430 = vadd.f32 %v422, %v428
          %v431 = vadd.f32 %v423, %v429
          %v432 = vlaneseq
          %v433 = vshrl.u32 %v432, 7
          %v434 = vsub.s32 3, %v433
          %v435 = vrot.slane %v383, %v434
          %v436 = vmul.f32 %v401, %v435
          %v437 = vmul.f32 %v402, %v435
          %v440 = vrot.slane %v436, 1
          %v441 = vrot.slane %v437, 1
          %v444 = vadd.f32 %v430, %v440
          %v445 = vadd.f32 %v431, %v441
          %v446 = vlaneseq
          %v447 = vshrl.u32 %v446, 7
          %v448 = vsub.s32 4, %v447
          %v449 = vrot.slane %v383, %v448
          %v450 = vmul.f32 %v400, %v449
          %v451 = vmul.f32 %v401, %v449
          %v452 = vlaneseq
          %v453 = vshrl.u32 %v452, 7
          %v454 = vsub.s32 5, %v453
          %v455 = vrot.slane %v383, %v454
          %v456 = vmul.f32 %v400, %v455
          %v457 = vmul.f32 %v401, %v455
          %v460 = vrot.slane %v456, 1
          %v461 = vrot.slane %v457, 1
          %v464 = vadd.f32 %v450, %v460
          %v465 = vadd.f32 %v451, %v461
          %v466 = vlaneseq
          %v467 = vshrl.u32 %v466, 7
          %v468 = vsub.s32 6, %v467
          %v469 = vrot.slane %v383, %v468
          %v470 = vmul.f32 %v401, %v469
          %v471 = vmul.f32 %v402, %v469
          %v472 = vadd.f32 %v464, %v470
          %v473 = vadd.f32 %v465, %v471
          %v474 = vlaneseq
          %v475 = vshrl.u32 %v474, 7
          %v476 = vsub.s32 7, %v475
          %v477 = vrot.slane %v383, %v476
          %v478 = vmul.f32 %v401, %v477
          %v479 = vmul.f32 %v402, %v477
          %v482 = vrot.slane %v478, 1
          %v483 = vrot.slane %v479, 1
          %v486 = vadd.f32 %v472, %v482
          %v487 = vadd.f32 %v473, %v483
          %v491 = vunpack.c.l.s4 1966171168
          %v492 = vunpack.c.0.s8 %v491
          %v493 = vlaneseq
          %v494 = vshrl.u32 %v493, 7
          %v495 = vsub.s32 %v492, %v494
          %v496 = vrot.slane %v444, %v495
          %v497 = vcombine.high %v496, %v496
          %v499 = vunpack.c.l.s4 1966171168
          %v500 = vunpack.c.0.s8 %v499
          %v501 = vlaneseq
          %v502 = vshrl.u32 %v501, 7
          %v503 = vsub.s32 %v500, %v502
          %v504 = vrot.slane %v496, %v503
          %v506 = vunpack.c.l.s4 1966171168
          %v507 = vunpack.c.0.s8 %v506
          %v508 = vlaneseq
          %v509 = vshrl.u32 %v508, 7
          %v510 = vsub.s32 %v507, %v509
          %v511 = vrot.slane %v497, %v510
          %v512 = vcombine.high %v504, %v504
          %v513 = vcombine.high %v511, %v511
          %v515 = vunpack.c.l.s4 1966171168
          %v516 = vunpack.c.0.s8 %v515
          %v517 = vlaneseq
          %v518 = vshrl.u32 %v517, 7
          %v519 = vsub.s32 %v516, %v518
          %v520 = vrot.slane %v445, %v519
          %v521 = vcombine.high %v520, %v520
          %v523 = vunpack.c.l.s4 1966171168
          %v524 = vunpack.c.0.s8 %v523
          %v525 = vlaneseq
          %v526 = vshrl.u32 %v525, 7
          %v527 = vsub.s32 %v524, %v526
          %v528 = vrot.slane %v520, %v527
          %v530 = vunpack.c.l.s4 1966171168
          %v531 = vunpack.c.0.s8 %v530
          %v532 = vlaneseq
          %v533 = vshrl.u32 %v532, 7
          %v534 = vsub.s32 %v531, %v533
          %v535 = vrot.slane %v521, %v534
          %v536 = vcombine.high %v528, %v528
          %v537 = vcombine.high %v535, %v535
          %v548 = vcombine.high %v486, %v486
          %v550 = vunpack.c.l.s4 1966171168
          %v551 = vunpack.c.0.s8 %v550
          %v552 = vlaneseq
          %v553 = vshrl.u32 %v552, 7
          %v554 = vsub.s32 %v551, %v553
          %v555 = vrot.slane %v486, %v554
          %v557 = vunpack.c.l.s4 1966171168
          %v558 = vunpack.c.0.s8 %v557
          %v559 = vlaneseq
          %v560 = vshrl.u32 %v559, 7
          %v561 = vsub.s32 %v558, %v560
          %v562 = vrot.slane %v548, %v561
          %v563 = vcombine.high %v555, %v555
          %v565 = vunpack.c.l.s4 1966171168
          %v566 = vunpack.c.0.s8 %v565
          %v567 = vlaneseq
          %v568 = vshrl.u32 %v567, 7
          %v569 = vsub.s32 %v566, %v568
          %v570 = vrot.slane %v555, %v569
          %v572 = vunpack.c.l.s4 1966171168
          %v573 = vunpack.c.0.s8 %v572
          %v574 = vlaneseq
          %v575 = vshrl.u32 %v574, 7
          %v576 = vsub.s32 %v573, %v575
          %v577 = vrot.slane %v562, %v576
          %v579 = vunpack.c.l.s4 1966171168
          %v580 = vunpack.c.0.s8 %v579
          %v581 = vlaneseq
          %v582 = vshrl.u32 %v581, 7
          %v583 = vsub.s32 %v580, %v582
          %v584 = vrot.slane %v563, %v583
          %v585 = vcombine.high %v570, %v570
          %v586 = vcombine.high %v584, %v584
          %v587 = vcombine.high %v487, %v487
          %v589 = vunpack.c.l.s4 1966171168
          %v590 = vunpack.c.0.s8 %v589
          %v591 = vlaneseq
          %v592 = vshrl.u32 %v591, 7
          %v593 = vsub.s32 %v590, %v592
          %v594 = vrot.slane %v487, %v593
          %v596 = vunpack.c.l.s4 1966171168
          %v597 = vunpack.c.0.s8 %v596
          %v598 = vlaneseq
          %v599 = vshrl.u32 %v598, 7
          %v600 = vsub.s32 %v597, %v599
          %v601 = vrot.slane %v587, %v600
          %v602 = vcombine.high %v594, %v594
          %v604 = vunpack.c.l.s4 1966171168
          %v605 = vunpack.c.0.s8 %v604
          %v606 = vlaneseq
          %v607 = vshrl.u32 %v606, 7
          %v608 = vsub.s32 %v605, %v607
          %v609 = vrot.slane %v594, %v608
          %v611 = vunpack.c.l.s4 1966171168
          %v612 = vunpack.c.0.s8 %v611
          %v613 = vlaneseq
          %v614 = vshrl.u32 %v613, 7
          %v615 = vsub.s32 %v612, %v614
          %v616 = vrot.slane %v601, %v615
          %v618 = vunpack.c.l.s4 1966171168
          %v619 = vunpack.c.0.s8 %v618
          %v620 = vlaneseq
          %v621 = vshrl.u32 %v620, 7
          %v622 = vsub.s32 %v619, %v621
          %v623 = vrot.slane %v602, %v622
          %v624 = vcombine.high %v609, %v609
          %v625 = vcombine.high %v623, %v623
          %v626 = vlaneseq
          %v627 = vshrl.u32 %v626, 7
          %v628 = vsub.s32 0, %v627
          %v629 = vrot.slane %v584, %v628
          %v630 = vlaneseq
          %v631 = vshrl.u32 %v630, 7
          %v632 = vsub.s32 0, %v631
          %v633 = vrot.slane %v585, %v632
          %v634 = vlaneseq
          %v635 = vshrl.u32 %v634, 7
          %v636 = vsub.s32 0, %v635
          %v637 = vrot.slane %v586, %v636
          %v638 = vlaneseq
          %v639 = vshrl.u32 %v638, 7
          %v640 = vsub.s32 0, %v639
          %v641 = vrot.slane %v577, %v640
          %v642 = vlaneseq
          %v643 = vshrl.u32 %v642, 7
          %v644 = vsub.s32 0, %v643
          %v645 = vrot.slane %v623, %v644
          %v646 = vlaneseq
          %v647 = vshrl.u32 %v646, 7
          %v648 = vsub.s32 0, %v647
          %v649 = vrot.slane %v624, %v648
          %v650 = vlaneseq
          %v651 = vshrl.u32 %v650, 7
          %v652 = vsub.s32 0, %v651
          %v653 = vrot.slane %v625, %v652
          %v654 = vlaneseq
          %v655 = vshrl.u32 %v654, 7
          %v656 = vsub.s32 0, %v655
          %v657 = vrot.slane %v616, %v656
          %vm666 = vcmask 1040384
          %v667 = vsel %vm666, %v504, %v629
          %v668 = vsel %vm666, %v511, %v633
          %v669 = vsel %vm666, %v512, %v637
          %v670 = vsel %vm666, %v513, %v641
          %v671 = vsel %vm666, %v528, %v645
          %v672 = vsel %vm666, %v535, %v649
          %v673 = vsel %vm666, %v536, %v653
          %v674 = vsel %vm666, %v537, %v657
          %v675 = vlaneseq
          %v676 = vshrl.u32 %v675, 7
          %v677 = vsub.s32 0, %v676
          %v678 = vrot.slane %v384, %v677
          %v679 = vmul.f32 %v401, %v678
          %v680 = vmul.f32 %v402, %v678
          %v681 = vlaneseq
          %v682 = vshrl.u32 %v681, 7
          %v683 = vsub.s32 1, %v682
          %v684 = vrot.slane %v384, %v683
          %v685 = vmul.f32 %v401, %v684
          %v686 = vmul.f32 %v402, %v684
          %v689 = vrot.slane %v685, 1
          %v690 = vrot.slane %v686, 1
          %v693 = vadd.f32 %v679, %v689
          %v694 = vadd.f32 %v680, %v690
          %v695 = vlaneseq
          %v696 = vshrl.u32 %v695, 7
          %v697 = vsub.s32 2, %v696
          %v698 = vrot.slane %v384, %v697
          %v699 = vmul.f32 %v402, %v698
          %v700 = vmul.f32 %v403, %v698
          %v701 = vadd.f32 %v693, %v699
          %v702 = vadd.f32 %v694, %v700
          %v703 = vlaneseq
          %v704 = vshrl.u32 %v703, 7
          %v705 = vsub.s32 3, %v704
          %v706 = vrot.slane %v384, %v705
          %v707 = vmul.f32 %v402, %v706
          %v708 = vmul.f32 %v403, %v706
          %v711 = vrot.slane %v707, 1
          %v712 = vrot.slane %v708, 1
          %v715 = vadd.f32 %v701, %v711
          %v716 = vadd.f32 %v702, %v712
          %v717 = vlaneseq
          %v718 = vshrl.u32 %v717, 7
          %v719 = vsub.s32 4, %v718
          %v720 = vrot.slane %v384, %v719
          %v721 = vmul.f32 %v401, %v720
          %v722 = vmul.f32 %v402, %v720
          %v723 = vlaneseq
          %v724 = vshrl.u32 %v723, 7
          %v725 = vsub.s32 5, %v724
          %v726 = vrot.slane %v384, %v725
          %v727 = vmul.f32 %v401, %v726
          %v728 = vmul.f32 %v402, %v726
          %v731 = vrot.slane %v727, 1
          %v732 = vrot.slane %v728, 1
          %v735 = vadd.f32 %v721, %v731
          %v736 = vadd.f32 %v722, %v732
          %v737 = vlaneseq
          %v738 = vshrl.u32 %v737, 7
          %v739 = vsub.s32 6, %v738
          %v740 = vrot.slane %v384, %v739
          %v741 = vmul.f32 %v402, %v740
          %v742 = vmul.f32 %v403, %v740
          %v743 = vadd.f32 %v735, %v741
          %v744 = vadd.f32 %v736, %v742
          %v745 = vlaneseq
          %v746 = vshrl.u32 %v745, 7
          %v747 = vsub.s32 7, %v746
          %v748 = vrot.slane %v384, %v747
          %v749 = vmul.f32 %v402, %v748
          %v750 = vmul.f32 %v403, %v748
          %v753 = vrot.slane %v749, 1
          %v754 = vrot.slane %v750, 1
          %v757 = vadd.f32 %v743, %v753
          %v758 = vadd.f32 %v744, %v754
          %v762 = vunpack.c.l.s4 1966171168
          %v763 = vunpack.c.0.s8 %v762
          %v764 = vlaneseq
          %v765 = vshrl.u32 %v764, 7
          %v766 = vsub.s32 %v763, %v765
          %v767 = vrot.slane %v715, %v766
          %v768 = vcombine.high %v767, %v767
          %v770 = vunpack.c.l.s4 1966171168
          %v771 = vunpack.c.0.s8 %v770
          %v772 = vlaneseq
          %v773 = vshrl.u32 %v772, 7
          %v774 = vsub.s32 %v771, %v773
          %v775 = vrot.slane %v767, %v774
          %v777 = vunpack.c.l.s4 1966171168
          %v778 = vunpack.c.0.s8 %v777
          %v779 = vlaneseq
          %v780 = vshrl.u32 %v779, 7
          %v781 = vsub.s32 %v778, %v780
          %v782 = vrot.slane %v768, %v781
          %v783 = vcombine.high %v775, %v775
          %v784 = vcombine.high %v782, %v782
          %v786 = vunpack.c.l.s4 1966171168
          %v787 = vunpack.c.0.s8 %v786
          %v788 = vlaneseq
          %v789 = vshrl.u32 %v788, 7
          %v790 = vsub.s32 %v787, %v789
          %v791 = vrot.slane %v716, %v790
          %v792 = vcombine.high %v791, %v791
          %v794 = vunpack.c.l.s4 1966171168
          %v795 = vunpack.c.0.s8 %v794
          %v796 = vlaneseq
          %v797 = vshrl.u32 %v796, 7
          %v798 = vsub.s32 %v795, %v797
          %v799 = vrot.slane %v791, %v798
          %v801 = vunpack.c.l.s4 1966171168
          %v802 = vunpack.c.0.s8 %v801
          %v803 = vlaneseq
          %v804 = vshrl.u32 %v803, 7
          %v805 = vsub.s32 %v802, %v804
          %v806 = vrot.slane %v792, %v805
          %v807 = vcombine.high %v799, %v799
          %v808 = vcombine.high %v806, %v806
          %v819 = vcombine.high %v757, %v757
          %v821 = vunpack.c.l.s4 1966171168
          %v822 = vunpack.c.0.s8 %v821
          %v823 = vlaneseq
          %v824 = vshrl.u32 %v823, 7
          %v825 = vsub.s32 %v822, %v824
          %v826 = vrot.slane %v757, %v825
          %v828 = vunpack.c.l.s4 1966171168
          %v829 = vunpack.c.0.s8 %v828
          %v830 = vlaneseq
          %v831 = vshrl.u32 %v830, 7
          %v832 = vsub.s32 %v829, %v831
          %v833 = vrot.slane %v819, %v832
          %v834 = vcombine.high %v826, %v826
          %v836 = vunpack.c.l.s4 1966171168
          %v837 = vunpack.c.0.s8 %v836
          %v838 = vlaneseq
          %v839 = vshrl.u32 %v838, 7
          %v840 = vsub.s32 %v837, %v839
          %v841 = vrot.slane %v826, %v840
          %v843 = vunpack.c.l.s4 1966171168
          %v844 = vunpack.c.0.s8 %v843
          %v845 = vlaneseq
          %v846 = vshrl.u32 %v845, 7
          %v847 = vsub.s32 %v844, %v846
          %v848 = vrot.slane %v833, %v847
          %v850 = vunpack.c.l.s4 1966171168
          %v851 = vunpack.c.0.s8 %v850
          %v852 = vlaneseq
          %v853 = vshrl.u32 %v852, 7
          %v854 = vsub.s32 %v851, %v853
          %v855 = vrot.slane %v834, %v854
          %v856 = vcombine.high %v841, %v841
          %v857 = vcombine.high %v855, %v855
          %v858 = vcombine.high %v758, %v758
          %v860 = vunpack.c.l.s4 1966171168
          %v861 = vunpack.c.0.s8 %v860
          %v862 = vlaneseq
          %v863 = vshrl.u32 %v862, 7
          %v864 = vsub.s32 %v861, %v863
          %v865 = vrot.slane %v758, %v864
          %v867 = vunpack.c.l.s4 1966171168
          %v868 = vunpack.c.0.s8 %v867
          %v869 = vlaneseq
          %v870 = vshrl.u32 %v869, 7
          %v871 = vsub.s32 %v868, %v870
          %v872 = vrot.slane %v858, %v871
          %v873 = vcombine.high %v865, %v865
          %v875 = vunpack.c.l.s4 1966171168
          %v876 = vunpack.c.0.s8 %v875
          %v877 = vlaneseq
          %v878 = vshrl.u32 %v877, 7
          %v879 = vsub.s32 %v876, %v878
          %v880 = vrot.slane %v865, %v879
          %v882 = vunpack.c.l.s4 1966171168
          %v883 = vunpack.c.0.s8 %v882
          %v884 = vlaneseq
          %v885 = vshrl.u32 %v884, 7
          %v886 = vsub.s32 %v883, %v885
          %v887 = vrot.slane %v872, %v886
          %v889 = vunpack.c.l.s4 1966171168
          %v890 = vunpack.c.0.s8 %v889
          %v891 = vlaneseq
          %v892 = vshrl.u32 %v891, 7
          %v893 = vsub.s32 %v890, %v892
          %v894 = vrot.slane %v873, %v893
          %v895 = vcombine.high %v880, %v880
          %v896 = vcombine.high %v894, %v894
          %v897 = vlaneseq
          %v898 = vshrl.u32 %v897, 7
          %v899 = vsub.s32 0, %v898
          %v900 = vrot.slane %v855, %v899
          %v901 = vlaneseq
          %v902 = vshrl.u32 %v901, 7
          %v903 = vsub.s32 0, %v902
          %v904 = vrot.slane %v856, %v903
          %v905 = vlaneseq
          %v906 = vshrl.u32 %v905, 7
          %v907 = vsub.s32 0, %v906
          %v908 = vrot.slane %v857, %v907
          %v909 = vlaneseq
          %v910 = vshrl.u32 %v909, 7
          %v911 = vsub.s32 0, %v910
          %v912 = vrot.slane %v848, %v911
          %v913 = vlaneseq
          %v914 = vshrl.u32 %v913, 7
          %v915 = vsub.s32 0, %v914
          %v916 = vrot.slane %v894, %v915
          %v917 = vlaneseq
          %v918 = vshrl.u32 %v917, 7
          %v919 = vsub.s32 0, %v918
          %v920 = vrot.slane %v895, %v919
          %v921 = vlaneseq
          %v922 = vshrl.u32 %v921, 7
          %v923 = vsub.s32 0, %v922
          %v924 = vrot.slane %v896, %v923
          %v925 = vlaneseq
          %v926 = vshrl.u32 %v925, 7
          %v927 = vsub.s32 0, %v926
          %v928 = vrot.slane %v887, %v927
          %v937 = vsel %vm666, %v775, %v900
          %v938 = vsel %vm666, %v782, %v904
          %v939 = vsel %vm666, %v783, %v908
          %v940 = vsel %vm666, %v784, %v912
          %v941 = vsel %vm666, %v799, %v916
          %v942 = vsel %vm666, %v806, %v920
          %v943 = vsel %vm666, %v807, %v924
          %v944 = vsel %vm666, %v808, %v928
          %s945 = smul.u32 %s392, 4
          %s946 = sadd.s32 %s945, 1
          %v963 = vcombine.low %v667, %v668
          %v964 = vcombine.low %v669, %v670
          %v966 = vunpack.c.l.s4 1983009808
          %v967 = vunpack.c.0.s8 %v966
          %v968 = vlaneseq
          %v969 = vshrl.u32 %v968, 7
          %v970 = vsub.s32 %v967, %v969
          %v971 = vrot.slane %v963, %v970
          %v973 = vunpack.c.l.s4 1983009808
          %v974 = vunpack.c.0.s8 %v973
          %v975 = vlaneseq
          %v976 = vshrl.u32 %v975, 7
          %v977 = vsub.s32 %v974, %v976
          %v978 = vrot.slane %v964, %v977
          %v979 = vcombine.low %v971, %v978
          %v980 = vcombine.low %v937, %v938
          %v981 = vcombine.low %v939, %v940
          %v983 = vunpack.c.l.s4 1983009808
          %v984 = vunpack.c.0.s8 %v983
          %v985 = vlaneseq
          %v986 = vshrl.u32 %v985, 7
          %v987 = vsub.s32 %v984, %v986
          %v988 = vrot.slane %v980, %v987
          %v990 = vunpack.c.l.s4 1983009808
          %v991 = vunpack.c.0.s8 %v990
          %v992 = vlaneseq
          %v993 = vshrl.u32 %v992, 7
          %v994 = vsub.s32 %v991, %v993
          %v995 = vrot.slane %v981, %v994
          %v996 = vcombine.low %v988, %v995
          %v997 = vcombine.low %v671, %v672
          %v998 = vcombine.low %v673, %v674
          %v1000 = vunpack.c.l.s4 1983009808
          %v1001 = vunpack.c.0.s8 %v1000
          %v1002 = vlaneseq
          %v1003 = vshrl.u32 %v1002, 7
          %v1004 = vsub.s32 %v1001, %v1003
          %v1005 = vrot.slane %v997, %v1004
          %v1007 = vunpack.c.l.s4 1983009808
          %v1008 = vunpack.c.0.s8 %v1007
          %v1009 = vlaneseq
          %v1010 = vshrl.u32 %v1009, 7
          %v1011 = vsub.s32 %v1008, %v1010
          %v1012 = vrot.slane %v998, %v1011
          %v1013 = vcombine.low %v1005, %v1012
          %v1014 = vcombine.low %v941, %v942
          %v1015 = vcombine.low %v943, %v944
          %v1017 = vunpack.c.l.s4 1983009808
          %v1018 = vunpack.c.0.s8 %v1017
          %v1019 = vlaneseq
          %v1020 = vshrl.u32 %v1019, 7
          %v1021 = vsub.s32 %v1018, %v1020
          %v1022 = vrot.slane %v1014, %v1021
          %v1024 = vunpack.c.l.s4 1983009808
          %v1025 = vunpack.c.0.s8 %v1024
          %v1026 = vlaneseq
          %v1027 = vshrl.u32 %v1026, 7
          %v1028 = vsub.s32 %v1025, %v1027
          %v1029 = vrot.slane %v1015, %v1028
          %v1030 = vcombine.low %v1022, %v1029
          %s1035 = smul.u32 %s946, 16
          %s1036 = scalar_lea.vmem [#allocation3], %s1035
          %1037 = vst.msk [vmem:[%s1036 + $0x1] sm:$0xff] %vm321, %v979
          %1038 = vst.msk [vmem:[%s1036 + $0x11] sm:$0xff] %vm321, %v996
          %1039 = vst.msk [vmem:[%s1036 + $0x21] sm:$0xff] %vm321, %v1013
          %1040 = vst.msk [vmem:[%s1036 + $0x31] sm:$0xff] %vm321, %v1030
          %v1041 = vlaneseq
          %v1042 = vshrl.u32 %v1041, 7
          %v1043 = vsub.s32 0, %v1042
          %v1044 = vrot.slane %v385, %v1043
          %v1045 = vmul.f32 %v400, %v1044
          %v1046 = vmul.f32 %v401, %v1044
          %v1047 = vlaneseq
          %v1048 = vshrl.u32 %v1047, 7
          %v1049 = vsub.s32 1, %v1048
          %v1050 = vrot.slane %v385, %v1049
          %v1051 = vmul.f32 %v400, %v1050
          %v1052 = vmul.f32 %v401, %v1050
          %v1055 = vrot.slane %v1051, 1
          %v1056 = vrot.slane %v1052, 1
          %v1059 = vadd.f32 %v1045, %v1055
          %v1060 = vadd.f32 %v1046, %v1056
          %v1061 = vlaneseq
          %v1062 = vshrl.u32 %v1061, 7
          %v1063 = vsub.s32 2, %v1062
          %v1064 = vrot.slane %v385, %v1063
          %v1065 = vmul.f32 %v401, %v1064
          %v1066 = vmul.f32 %v402, %v1064
          %v1067 = vadd.f32 %v1059, %v1065
          %v1068 = vadd.f32 %v1060, %v1066
          %v1069 = vlaneseq
          %v1070 = vshrl.u32 %v1069, 7
          %v1071 = vsub.s32 3, %v1070
          %v1072 = vrot.slane %v385, %v1071
          %v1073 = vmul.f32 %v401, %v1072
          %v1074 = vmul.f32 %v402, %v1072
          %v1077 = vrot.slane %v1073, 1
          %v1078 = vrot.slane %v1074, 1
          %v1081 = vadd.f32 %v1067, %v1077
          %v1082 = vadd.f32 %v1068, %v1078
          %v1083 = vlaneseq
          %v1084 = vshrl.u32 %v1083, 7
          %v1085 = vsub.s32 4, %v1084
          %v1086 = vrot.slane %v385, %v1085
          %v1087 = vmul.f32 %v400, %v1086
          %v1088 = vmul.f32 %v401, %v1086
          %v1089 = vlaneseq
          %v1090 = vshrl.u32 %v1089, 7
          %v1091 = vsub.s32 5, %v1090
          %v1092 = vrot.slane %v385, %v1091
          %v1093 = vmul.f32 %v400, %v1092
          %v1094 = vmul.f32 %v401, %v1092
          %v1097 = vrot.slane %v1093, 1
          %v1098 = vrot.slane %v1094, 1
          %v1101 = vadd.f32 %v1087, %v1097
          %v1102 = vadd.f32 %v1088, %v1098
          %v1103 = vlaneseq
          %v1104 = vshrl.u32 %v1103, 7
          %v1105 = vsub.s32 6, %v1104
          %v1106 = vrot.slane %v385, %v1105
          %v1107 = vmul.f32 %v401, %v1106
          %v1108 = vmul.f32 %v402, %v1106
          %v1109 = vadd.f32 %v1101, %v1107
          %v1110 = vadd.f32 %v1102, %v1108
          %v1111 = vlaneseq
          %v1112 = vshrl.u32 %v1111, 7
          %v1113 = vsub.s32 7, %v1112
          %v1114 = vrot.slane %v385, %v1113
          %v1115 = vmul.f32 %v401, %v1114
          %v1116 = vmul.f32 %v402, %v1114
          %v1119 = vrot.slane %v1115, 1
          %v1120 = vrot.slane %v1116, 1
          %v1123 = vadd.f32 %v1109, %v1119
          %v1124 = vadd.f32 %v1110, %v1120
          %v1128 = vunpack.c.l.s4 1966171168
          %v1129 = vunpack.c.0.s8 %v1128
          %v1130 = vlaneseq
          %v1131 = vshrl.u32 %v1130, 7
          %v1132 = vsub.s32 %v1129, %v1131
          %v1133 = vrot.slane %v1081, %v1132
          %v1134 = vcombine.high %v1133, %v1133
          %v1136 = vunpack.c.l.s4 1966171168
          %v1137 = vunpack.c.0.s8 %v1136
          %v1138 = vlaneseq
          %v1139 = vshrl.u32 %v1138, 7
          %v1140 = vsub.s32 %v1137, %v1139
          %v1141 = vrot.slane %v1133, %v1140
          %v1143 = vunpack.c.l.s4 1966171168
          %v1144 = vunpack.c.0.s8 %v1143
          %v1145 = vlaneseq
          %v1146 = vshrl.u32 %v1145, 7
          %v1147 = vsub.s32 %v1144, %v1146
          %v1148 = vrot.slane %v1134, %v1147
          %v1149 = vcombine.high %v1141, %v1141
          %v1150 = vcombine.high %v1148, %v1148
          %v1152 = vunpack.c.l.s4 1966171168
          %v1153 = vunpack.c.0.s8 %v1152
          %v1154 = vlaneseq
          %v1155 = vshrl.u32 %v1154, 7
          %v1156 = vsub.s32 %v1153, %v1155
          %v1157 = vrot.slane %v1082, %v1156
          %v1158 = vcombine.high %v1157, %v1157
          %v1160 = vunpack.c.l.s4 1966171168
          %v1161 = vunpack.c.0.s8 %v1160
          %v1162 = vlaneseq
          %v1163 = vshrl.u32 %v1162, 7
          %v1164 = vsub.s32 %v1161, %v1163
          %v1165 = vrot.slane %v1157, %v1164
          %v1167 = vunpack.c.l.s4 1966171168
          %v1168 = vunpack.c.0.s8 %v1167
          %v1169 = vlaneseq
          %v1170 = vshrl.u32 %v1169, 7
          %v1171 = vsub.s32 %v1168, %v1170
          %v1172 = vrot.slane %v1158, %v1171
          %v1173 = vcombine.high %v1165, %v1165
          %v1174 = vcombine.high %v1172, %v1172
          %v1185 = vcombine.high %v1123, %v1123
          %v1187 = vunpack.c.l.s4 1966171168
          %v1188 = vunpack.c.0.s8 %v1187
          %v1189 = vlaneseq
          %v1190 = vshrl.u32 %v1189, 7
          %v1191 = vsub.s32 %v1188, %v1190
          %v1192 = vrot.slane %v1123, %v1191
          %v1194 = vunpack.c.l.s4 1966171168
          %v1195 = vunpack.c.0.s8 %v1194
          %v1196 = vlaneseq
          %v1197 = vshrl.u32 %v1196, 7
          %v1198 = vsub.s32 %v1195, %v1197
          %v1199 = vrot.slane %v1185, %v1198
          %v1200 = vcombine.high %v1192, %v1192
          %v1202 = vunpack.c.l.s4 1966171168
          %v1203 = vunpack.c.0.s8 %v1202
          %v1204 = vlaneseq
          %v1205 = vshrl.u32 %v1204, 7
          %v1206 = vsub.s32 %v1203, %v1205
          %v1207 = vrot.slane %v1192, %v1206
          %v1209 = vunpack.c.l.s4 1966171168
          %v1210 = vunpack.c.0.s8 %v1209
          %v1211 = vlaneseq
          %v1212 = vshrl.u32 %v1211, 7
          %v1213 = vsub.s32 %v1210, %v1212
          %v1214 = vrot.slane %v1199, %v1213
          %v1216 = vunpack.c.l.s4 1966171168
          %v1217 = vunpack.c.0.s8 %v1216
          %v1218 = vlaneseq
          %v1219 = vshrl.u32 %v1218, 7
          %v1220 = vsub.s32 %v1217, %v1219
          %v1221 = vrot.slane %v1200, %v1220
          %v1222 = vcombine.high %v1207, %v1207
          %v1223 = vcombine.high %v1221, %v1221
          %v1224 = vcombine.high %v1124, %v1124
          %v1226 = vunpack.c.l.s4 1966171168
          %v1227 = vunpack.c.0.s8 %v1226
          %v1228 = vlaneseq
          %v1229 = vshrl.u32 %v1228, 7
          %v1230 = vsub.s32 %v1227, %v1229
          %v1231 = vrot.slane %v1124, %v1230
          %v1233 = vunpack.c.l.s4 1966171168
          %v1234 = vunpack.c.0.s8 %v1233
          %v1235 = vlaneseq
          %v1236 = vshrl.u32 %v1235, 7
          %v1237 = vsub.s32 %v1234, %v1236
          %v1238 = vrot.slane %v1224, %v1237
          %v1239 = vcombine.high %v1231, %v1231
          %v1241 = vunpack.c.l.s4 1966171168
          %v1242 = vunpack.c.0.s8 %v1241
          %v1243 = vlaneseq
          %v1244 = vshrl.u32 %v1243, 7
          %v1245 = vsub.s32 %v1242, %v1244
          %v1246 = vrot.slane %v1231, %v1245
          %v1248 = vunpack.c.l.s4 1966171168
          %v1249 = vunpack.c.0.s8 %v1248
          %v1250 = vlaneseq
          %v1251 = vshrl.u32 %v1250, 7
          %v1252 = vsub.s32 %v1249, %v1251
          %v1253 = vrot.slane %v1238, %v1252
          %v1255 = vunpack.c.l.s4 1966171168
          %v1256 = vunpack.c.0.s8 %v1255
          %v1257 = vlaneseq
          %v1258 = vshrl.u32 %v1257, 7
          %v1259 = vsub.s32 %v1256, %v1258
          %v1260 = vrot.slane %v1239, %v1259
          %v1261 = vcombine.high %v1246, %v1246
          %v1262 = vcombine.high %v1260, %v1260
          %v1263 = vlaneseq
          %v1264 = vshrl.u32 %v1263, 7
          %v1265 = vsub.s32 0, %v1264
          %v1266 = vrot.slane %v1221, %v1265
          %v1267 = vlaneseq
          %v1268 = vshrl.u32 %v1267, 7
          %v1269 = vsub.s32 0, %v1268
          %v1270 = vrot.slane %v1222, %v1269
          %v1271 = vlaneseq
          %v1272 = vshrl.u32 %v1271, 7
          %v1273 = vsub.s32 0, %v1272
          %v1274 = vrot.slane %v1223, %v1273
          %v1275 = vlaneseq
          %v1276 = vshrl.u32 %v1275, 7
          %v1277 = vsub.s32 0, %v1276
          %v1278 = vrot.slane %v1214, %v1277
          %v1279 = vlaneseq
          %v1280 = vshrl.u32 %v1279, 7
          %v1281 = vsub.s32 0, %v1280
          %v1282 = vrot.slane %v1260, %v1281
          %v1283 = vlaneseq
          %v1284 = vshrl.u32 %v1283, 7
          %v1285 = vsub.s32 0, %v1284
          %v1286 = vrot.slane %v1261, %v1285
          %v1287 = vlaneseq
          %v1288 = vshrl.u32 %v1287, 7
          %v1289 = vsub.s32 0, %v1288
          %v1290 = vrot.slane %v1262, %v1289
          %v1291 = vlaneseq
          %v1292 = vshrl.u32 %v1291, 7
          %v1293 = vsub.s32 0, %v1292
          %v1294 = vrot.slane %v1253, %v1293
          %v1303 = vsel %vm666, %v1141, %v1266
          %v1304 = vsel %vm666, %v1148, %v1270
          %v1305 = vsel %vm666, %v1149, %v1274
          %v1306 = vsel %vm666, %v1150, %v1278
          %v1307 = vsel %vm666, %v1165, %v1282
          %v1308 = vsel %vm666, %v1172, %v1286
          %v1309 = vsel %vm666, %v1173, %v1290
          %v1310 = vsel %vm666, %v1174, %v1294
          %v1311 = vlaneseq
          %v1312 = vshrl.u32 %v1311, 7
          %v1313 = vsub.s32 0, %v1312
          %v1314 = vrot.slane %v386, %v1313
          %v1315 = vmul.f32 %v401, %v1314
          %v1316 = vmul.f32 %v402, %v1314
          %v1317 = vlaneseq
          %v1318 = vshrl.u32 %v1317, 7
          %v1319 = vsub.s32 1, %v1318
          %v1320 = vrot.slane %v386, %v1319
          %v1321 = vmul.f32 %v401, %v1320
          %v1322 = vmul.f32 %v402, %v1320
          %v1325 = vrot.slane %v1321, 1
          %v1326 = vrot.slane %v1322, 1
          %v1329 = vadd.f32 %v1315, %v1325
          %v1330 = vadd.f32 %v1316, %v1326
          %v1331 = vlaneseq
          %v1332 = vshrl.u32 %v1331, 7
          %v1333 = vsub.s32 2, %v1332
          %v1334 = vrot.slane %v386, %v1333
          %v1335 = vmul.f32 %v402, %v1334
          %v1336 = vmul.f32 %v403, %v1334
          %v1337 = vadd.f32 %v1329, %v1335
          %v1338 = vadd.f32 %v1330, %v1336
          %v1339 = vlaneseq
          %v1340 = vshrl.u32 %v1339, 7
          %v1341 = vsub.s32 3, %v1340
          %v1342 = vrot.slane %v386, %v1341
          %v1343 = vmul.f32 %v402, %v1342
          %v1344 = vmul.f32 %v403, %v1342
          %v1347 = vrot.slane %v1343, 1
          %v1348 = vrot.slane %v1344, 1
          %v1351 = vadd.f32 %v1337, %v1347
          %v1352 = vadd.f32 %v1338, %v1348
          %v1353 = vlaneseq
          %v1354 = vshrl.u32 %v1353, 7
          %v1355 = vsub.s32 4, %v1354
          %v1356 = vrot.slane %v386, %v1355
          %v1357 = vmul.f32 %v401, %v1356
          %v1358 = vmul.f32 %v402, %v1356
          %v1359 = vlaneseq
          %v1360 = vshrl.u32 %v1359, 7
          %v1361 = vsub.s32 5, %v1360
          %v1362 = vrot.slane %v386, %v1361
          %v1363 = vmul.f32 %v401, %v1362
          %v1364 = vmul.f32 %v402, %v1362
          %v1367 = vrot.slane %v1363, 1
          %v1368 = vrot.slane %v1364, 1
          %v1371 = vadd.f32 %v1357, %v1367
          %v1372 = vadd.f32 %v1358, %v1368
          %v1373 = vlaneseq
          %v1374 = vshrl.u32 %v1373, 7
          %v1375 = vsub.s32 6, %v1374
          %v1376 = vrot.slane %v386, %v1375
          %v1377 = vmul.f32 %v402, %v1376
          %v1378 = vmul.f32 %v403, %v1376
          %v1379 = vadd.f32 %v1371, %v1377
          %v1380 = vadd.f32 %v1372, %v1378
          %v1381 = vlaneseq
          %v1382 = vshrl.u32 %v1381, 7
          %v1383 = vsub.s32 7, %v1382
          %v1384 = vrot.slane %v386, %v1383
          %v1385 = vmul.f32 %v402, %v1384
          %v1386 = vmul.f32 %v403, %v1384
          %v1389 = vrot.slane %v1385, 1
          %v1390 = vrot.slane %v1386, 1
          %v1393 = vadd.f32 %v1379, %v1389
          %v1394 = vadd.f32 %v1380, %v1390
          %v1398 = vunpack.c.l.s4 1966171168
          %v1399 = vunpack.c.0.s8 %v1398
          %v1400 = vlaneseq
          %v1401 = vshrl.u32 %v1400, 7
          %v1402 = vsub.s32 %v1399, %v1401
          %v1403 = vrot.slane %v1351, %v1402
          %v1404 = vcombine.high %v1403, %v1403
          %v1406 = vunpack.c.l.s4 1966171168
          %v1407 = vunpack.c.0.s8 %v1406
          %v1408 = vlaneseq
          %v1409 = vshrl.u32 %v1408, 7
          %v1410 = vsub.s32 %v1407, %v1409
          %v1411 = vrot.slane %v1403, %v1410
          %v1413 = vunpack.c.l.s4 1966171168
          %v1414 = vunpack.c.0.s8 %v1413
          %v1415 = vlaneseq
          %v1416 = vshrl.u32 %v1415, 7
          %v1417 = vsub.s32 %v1414, %v1416
          %v1418 = vrot.slane %v1404, %v1417
          %v1419 = vcombine.high %v1411, %v1411
          %v1420 = vcombine.high %v1418, %v1418
          %v1422 = vunpack.c.l.s4 1966171168
          %v1423 = vunpack.c.0.s8 %v1422
          %v1424 = vlaneseq
          %v1425 = vshrl.u32 %v1424, 7
          %v1426 = vsub.s32 %v1423, %v1425
          %v1427 = vrot.slane %v1352, %v1426
          %v1428 = vcombine.high %v1427, %v1427
          %v1430 = vunpack.c.l.s4 1966171168
          %v1431 = vunpack.c.0.s8 %v1430
          %v1432 = vlaneseq
          %v1433 = vshrl.u32 %v1432, 7
          %v1434 = vsub.s32 %v1431, %v1433
          %v1435 = vrot.slane %v1427, %v1434
          %v1437 = vunpack.c.l.s4 1966171168
          %v1438 = vunpack.c.0.s8 %v1437
          %v1439 = vlaneseq
          %v1440 = vshrl.u32 %v1439, 7
          %v1441 = vsub.s32 %v1438, %v1440
          %v1442 = vrot.slane %v1428, %v1441
          %v1443 = vcombine.high %v1435, %v1435
          %v1444 = vcombine.high %v1442, %v1442
          %v1455 = vcombine.high %v1393, %v1393
          %v1457 = vunpack.c.l.s4 1966171168
          %v1458 = vunpack.c.0.s8 %v1457
          %v1459 = vlaneseq
          %v1460 = vshrl.u32 %v1459, 7
          %v1461 = vsub.s32 %v1458, %v1460
          %v1462 = vrot.slane %v1393, %v1461
          %v1464 = vunpack.c.l.s4 1966171168
          %v1465 = vunpack.c.0.s8 %v1464
          %v1466 = vlaneseq
          %v1467 = vshrl.u32 %v1466, 7
          %v1468 = vsub.s32 %v1465, %v1467
          %v1469 = vrot.slane %v1455, %v1468
          %v1470 = vcombine.high %v1462, %v1462
          %v1472 = vunpack.c.l.s4 1966171168
          %v1473 = vunpack.c.0.s8 %v1472
          %v1474 = vlaneseq
          %v1475 = vshrl.u32 %v1474, 7
          %v1476 = vsub.s32 %v1473, %v1475
          %v1477 = vrot.slane %v1462, %v1476
          %v1479 = vunpack.c.l.s4 1966171168
          %v1480 = vunpack.c.0.s8 %v1479
          %v1481 = vlaneseq
          %v1482 = vshrl.u32 %v1481, 7
          %v1483 = vsub.s32 %v1480, %v1482
          %v1484 = vrot.slane %v1469, %v1483
          %v1486 = vunpack.c.l.s4 1966171168
          %v1487 = vunpack.c.0.s8 %v1486
          %v1488 = vlaneseq
          %v1489 = vshrl.u32 %v1488, 7
          %v1490 = vsub.s32 %v1487, %v1489
          %v1491 = vrot.slane %v1470, %v1490
          %v1492 = vcombine.high %v1477, %v1477
          %v1493 = vcombine.high %v1491, %v1491
          %v1494 = vcombine.high %v1394, %v1394
          %v1496 = vunpack.c.l.s4 1966171168
          %v1497 = vunpack.c.0.s8 %v1496
          %v1498 = vlaneseq
          %v1499 = vshrl.u32 %v1498, 7
          %v1500 = vsub.s32 %v1497, %v1499
          %v1501 = vrot.slane %v1394, %v1500
          %v1503 = vunpack.c.l.s4 1966171168
          %v1504 = vunpack.c.0.s8 %v1503
          %v1505 = vlaneseq
          %v1506 = vshrl.u32 %v1505, 7
          %v1507 = vsub.s32 %v1504, %v1506
          %v1508 = vrot.slane %v1494, %v1507
          %v1509 = vcombine.high %v1501, %v1501
          %v1511 = vunpack.c.l.s4 1966171168
          %v1512 = vunpack.c.0.s8 %v1511
          %v1513 = vlaneseq
          %v1514 = vshrl.u32 %v1513, 7
          %v1515 = vsub.s32 %v1512, %v1514
          %v1516 = vrot.slane %v1501, %v1515
          %v1518 = vunpack.c.l.s4 1966171168
          %v1519 = vunpack.c.0.s8 %v1518
          %v1520 = vlaneseq
          %v1521 = vshrl.u32 %v1520, 7
          %v1522 = vsub.s32 %v1519, %v1521
          %v1523 = vrot.slane %v1508, %v1522
          %v1525 = vunpack.c.l.s4 1966171168
          %v1526 = vunpack.c.0.s8 %v1525
          %v1527 = vlaneseq
          %v1528 = vshrl.u32 %v1527, 7
          %v1529 = vsub.s32 %v1526, %v1528
          %v1530 = vrot.slane %v1509, %v1529
          %v1531 = vcombine.high %v1516, %v1516
          %v1532 = vcombine.high %v1530, %v1530
          %v1533 = vlaneseq
          %v1534 = vshrl.u32 %v1533, 7
          %v1535 = vsub.s32 0, %v1534
          %v1536 = vrot.slane %v1491, %v1535
          %v1537 = vlaneseq
          %v1538 = vshrl.u32 %v1537, 7
          %v1539 = vsub.s32 0, %v1538
          %v1540 = vrot.slane %v1492, %v1539
          %v1541 = vlaneseq
          %v1542 = vshrl.u32 %v1541, 7
          %v1543 = vsub.s32 0, %v1542
          %v1544 = vrot.slane %v1493, %v1543
          %v1545 = vlaneseq
          %v1546 = vshrl.u32 %v1545, 7
          %v1547 = vsub.s32 0, %v1546
          %v1548 = vrot.slane %v1484, %v1547
          %v1549 = vlaneseq
          %v1550 = vshrl.u32 %v1549, 7
          %v1551 = vsub.s32 0, %v1550
          %v1552 = vrot.slane %v1530, %v1551
          %v1553 = vlaneseq
          %v1554 = vshrl.u32 %v1553, 7
          %v1555 = vsub.s32 0, %v1554
          %v1556 = vrot.slane %v1531, %v1555
          %v1557 = vlaneseq
          %v1558 = vshrl.u32 %v1557, 7
          %v1559 = vsub.s32 0, %v1558
          %v1560 = vrot.slane %v1532, %v1559
          %v1561 = vlaneseq
          %v1562 = vshrl.u32 %v1561, 7
          %v1563 = vsub.s32 0, %v1562
          %v1564 = vrot.slane %v1523, %v1563
          %v1573 = vsel %vm666, %v1411, %v1536
          %v1574 = vsel %vm666, %v1418, %v1540
          %v1575 = vsel %vm666, %v1419, %v1544
          %v1576 = vsel %vm666, %v1420, %v1548
          %v1577 = vsel %vm666, %v1435, %v1552
          %v1578 = vsel %vm666, %v1442, %v1556
          %v1579 = vsel %vm666, %v1443, %v1560
          %v1580 = vsel %vm666, %v1444, %v1564
          %v1597 = vcombine.low %v1303, %v1304
          %v1598 = vcombine.low %v1305, %v1306
          %v1600 = vunpack.c.l.s4 1983009808
          %v1601 = vunpack.c.0.s8 %v1600
          %v1602 = vlaneseq
          %v1603 = vshrl.u32 %v1602, 7
          %v1604 = vsub.s32 %v1601, %v1603
          %v1605 = vrot.slane %v1597, %v1604
          %v1607 = vunpack.c.l.s4 1983009808
          %v1608 = vunpack.c.0.s8 %v1607
          %v1609 = vlaneseq
          %v1610 = vshrl.u32 %v1609, 7
          %v1611 = vsub.s32 %v1608, %v1610
          %v1612 = vrot.slane %v1598, %v1611
          %v1613 = vcombine.low %v1605, %v1612
          %v1614 = vcombine.low %v1573, %v1574
          %v1615 = vcombine.low %v1575, %v1576
          %v1617 = vunpack.c.l.s4 1983009808
          %v1618 = vunpack.c.0.s8 %v1617
          %v1619 = vlaneseq
          %v1620 = vshrl.u32 %v1619, 7
          %v1621 = vsub.s32 %v1618, %v1620
          %v1622 = vrot.slane %v1614, %v1621
          %v1624 = vunpack.c.l.s4 1983009808
          %v1625 = vunpack.c.0.s8 %v1624
          %v1626 = vlaneseq
          %v1627 = vshrl.u32 %v1626, 7
          %v1628 = vsub.s32 %v1625, %v1627
          %v1629 = vrot.slane %v1615, %v1628
          %v1630 = vcombine.low %v1622, %v1629
          %v1631 = vcombine.low %v1307, %v1308
          %v1632 = vcombine.low %v1309, %v1310
          %v1634 = vunpack.c.l.s4 1983009808
          %v1635 = vunpack.c.0.s8 %v1634
          %v1636 = vlaneseq
          %v1637 = vshrl.u32 %v1636, 7
          %v1638 = vsub.s32 %v1635, %v1637
          %v1639 = vrot.slane %v1631, %v1638
          %v1641 = vunpack.c.l.s4 1983009808
          %v1642 = vunpack.c.0.s8 %v1641
          %v1643 = vlaneseq
          %v1644 = vshrl.u32 %v1643, 7
          %v1645 = vsub.s32 %v1642, %v1644
          %v1646 = vrot.slane %v1632, %v1645
          %v1647 = vcombine.low %v1639, %v1646
          %v1648 = vcombine.low %v1577, %v1578
          %v1649 = vcombine.low %v1579, %v1580
          %v1651 = vunpack.c.l.s4 1983009808
          %v1652 = vunpack.c.0.s8 %v1651
          %v1653 = vlaneseq
          %v1654 = vshrl.u32 %v1653, 7
          %v1655 = vsub.s32 %v1652, %v1654
          %v1656 = vrot.slane %v1648, %v1655
          %v1658 = vunpack.c.l.s4 1983009808
          %v1659 = vunpack.c.0.s8 %v1658
          %v1660 = vlaneseq
          %v1661 = vshrl.u32 %v1660, 7
          %v1662 = vsub.s32 %v1659, %v1661
          %v1663 = vrot.slane %v1649, %v1662
          %v1664 = vcombine.low %v1656, %v1663
          %s1669 = scalar_lea.vmem [#allocation4], %s1035
          %1670 = vst.msk [vmem:[%s1669 + $0x1] sm:$0xff] %vm321, %v1613
          %1671 = vst.msk [vmem:[%s1669 + $0x11] sm:$0xff] %vm321, %v1630
          %1672 = vst.msk [vmem:[%s1669 + $0x21] sm:$0xff] %vm321, %v1647
          %1673 = vst.msk [vmem:[%s1669 + $0x31] sm:$0xff] %vm321, %v1664
        $region57: #{tpu_custom_call.1} parent=51 // loop_footer
          %s396 = sadd.s32 1, %s392
        $region58: #{tpu_custom_call.1} parent=51 // loop_footer_branch
          %391 = sbr.rel target = $region54
        $region59: #{tpu_custom_call.1} parent=51 // loop_exit
          _
        %v1674 = vld [vmem:[%s5] sm:$0x1]
        %v1675 = vld [vmem:[%s6] sm:$0xff]
        %v1676 = vld [vmem:[%s6 + $0x8] sm:$0xff]
        %v1677 = vld [vmem:[%s6 + $0x10] sm:$0xff]
        %v1678 = vld [vmem:[%s6 + $0x18] sm:$0xff]
        %v1679 = vld [vmem:[%s6 + $0x20] sm:$0xff]
        %v1680 = vld [vmem:[%s6 + $0x28] sm:$0xff]
        %v1681 = vld [vmem:[%s6 + $0x30] sm:$0xff]
        %v1682 = vld [vmem:[%s6 + $0x38] sm:$0xff]
        %v1683 = vld [vmem:[%s7] sm:$0x1]
        loop: start=0, step=1, limit=2
        $region60: #{tpu_custom_call.1} parent=51 // loop_pre_header
          _
        $region61: #{tpu_custom_call.1} parent=51 // loop_header
          %s1685 = sphi 0, %s1689
          %p1686 = scmp.ge.s32.totalorder %s1685, 2
        $region62: #{tpu_custom_call.1} parent=51 // loop_header_branch
          %1688 = sbr.rel (%p1686) target = $region66
        $region63: #{tpu_custom_call.1} parent=51 // loop_body
          %s1690 = smul.u32 %s1685, 4
          %s1691 = smul.u32 %s1690, 16
          %s1692 = scalar_lea.vmem [#allocation3], %s1691
          %v1693 = vld [vmem:[%s1692] sm:$0xff]
          %v1694 = vld [vmem:[%s1692 + $0x8] sm:$0x3]
          %v1695 = vld [vmem:[%s1692 + $0x10] sm:$0xff]
          %v1696 = vld [vmem:[%s1692 + $0x18] sm:$0x3]
          %v1697 = vld [vmem:[%s1692 + $0x20] sm:$0xff]
          %v1698 = vld [vmem:[%s1692 + $0x28] sm:$0x3]
          %v1699 = vld [vmem:[%s1692 + $0x30] sm:$0xff]
          %v1700 = vld [vmem:[%s1692 + $0x38] sm:$0x3]
          %v1701 = vlaneseq
          %v1702 = vshrl.u32 %v1701, 7
          %v1703 = vsub.s32 0, %v1702
          %v1704 = vrot.slane %v387, %v1703
          %v1705 = vmul.f32 %v1693, %v1704
          %v1706 = vmul.f32 %v1695, %v1704
          %v1707 = vmul.f32 %v1697, %v1704
          %v1708 = vmul.f32 %v1699, %v1704
          %v1709 = vlaneseq
          %v1710 = vshrl.u32 %v1709, 7
          %v1711 = vsub.s32 1, %v1710
          %v1712 = vrot.slane %v387, %v1711
          %v1713 = vmul.f32 %v1693, %v1712
          %v1714 = vmul.f32 %v1694, %v1712
          %v1715 = vmul.f32 %v1695, %v1712
          %v1716 = vmul.f32 %v1696, %v1712
          %v1717 = vmul.f32 %v1697, %v1712
          %v1718 = vmul.f32 %v1698, %v1712
          %v1719 = vmul.f32 %v1699, %v1712
          %v1720 = vmul.f32 %v1700, %v1712
          %vm1729 = vcmask 1046528
          %v1730 = vrot.slane %v1713, 1
          %v1731 = vrot.slane %v1714, 1
          %v1732 = vsel %vm1729, %v1730, %v1731
          %v1733 = vrot.slane %v1715, 1
          %v1734 = vrot.slane %v1716, 1
          %v1735 = vsel %vm1729, %v1733, %v1734
          %v1736 = vrot.slane %v1717, 1
          %v1737 = vrot.slane %v1718, 1
          %v1738 = vsel %vm1729, %v1736, %v1737
          %v1739 = vrot.slane %v1719, 1
          %v1740 = vrot.slane %v1720, 1
          %v1741 = vsel %vm1729, %v1739, %v1740
          %v1746 = vadd.f32 %v1705, %v1732
          %v1747 = vadd.f32 %v1706, %v1735
          %v1748 = vadd.f32 %v1707, %v1738
          %v1749 = vadd.f32 %v1708, %v1741
          %v1750 = vlaneseq
          %v1751 = vshrl.u32 %v1750, 7
          %v1752 = vsub.s32 2, %v1751
          %v1753 = vrot.slane %v387, %v1752
          %v1754 = vmul.f32 %v1693, %v1753
          %v1755 = vmul.f32 %v1694, %v1753
          %v1756 = vmul.f32 %v1695, %v1753
          %v1757 = vmul.f32 %v1696, %v1753
          %v1758 = vmul.f32 %v1697, %v1753
          %v1759 = vmul.f32 %v1698, %v1753
          %v1760 = vmul.f32 %v1699, %v1753
          %v1761 = vmul.f32 %v1700, %v1753
          %vm1770 = vcmask 1045504
          %v1771 = vrot.slane %v1754, 2
          %v1772 = vrot.slane %v1755, 2
          %v1773 = vsel %vm1770, %v1771, %v1772
          %v1774 = vrot.slane %v1756, 2
          %v1775 = vrot.slane %v1757, 2
          %v1776 = vsel %vm1770, %v1774, %v1775
          %v1777 = vrot.slane %v1758, 2
          %v1778 = vrot.slane %v1759, 2
          %v1779 = vsel %vm1770, %v1777, %v1778
          %v1780 = vrot.slane %v1760, 2
          %v1781 = vrot.slane %v1761, 2
          %v1782 = vsel %vm1770, %v1780, %v1781
          %v1787 = vadd.f32 %v1746, %v1773
          %v1788 = vadd.f32 %v1747, %v1776
          %v1789 = vadd.f32 %v1748, %v1779
          %v1790 = vadd.f32 %v1749, %v1782
          %s1791 = sadd.s32 %s1690, 1
          %s1792 = smul.u32 %s1791, 16
          %s1793 = scalar_lea.vmem [#allocation3], %s1792
          %v1794 = vld [vmem:[%s1793] sm:$0xff]
          %v1795 = vld [vmem:[%s1793 + $0x8] sm:$0x3]
          %v1796 = vld [vmem:[%s1793 + $0x10] sm:$0xff]
          %v1797 = vld [vmem:[%s1793 + $0x18] sm:$0x3]
          %v1798 = vld [vmem:[%s1793 + $0x20] sm:$0xff]
          %v1799 = vld [vmem:[%s1793 + $0x28] sm:$0x3]
          %v1800 = vld [vmem:[%s1793 + $0x30] sm:$0xff]
          %v1801 = vld [vmem:[%s1793 + $0x38] sm:$0x3]
          %v1802 = vlaneseq
          %v1803 = vshrl.u32 %v1802, 7
          %v1804 = vsub.s32 3, %v1803
          %v1805 = vrot.slane %v387, %v1804
          %v1806 = vmul.f32 %v1794, %v1805
          %v1807 = vmul.f32 %v1796, %v1805
          %v1808 = vmul.f32 %v1798, %v1805
          %v1809 = vmul.f32 %v1800, %v1805
          %v1810 = vadd.f32 %v1787, %v1806
          %v1811 = vadd.f32 %v1788, %v1807
          %v1812 = vadd.f32 %v1789, %v1808
          %v1813 = vadd.f32 %v1790, %v1809
          %v1814 = vlaneseq
          %v1815 = vshrl.u32 %v1814, 7
          %v1816 = vsub.s32 4, %v1815
          %v1817 = vrot.slane %v387, %v1816
          %v1818 = vmul.f32 %v1794, %v1817
          %v1819 = vmul.f32 %v1795, %v1817
          %v1820 = vmul.f32 %v1796, %v1817
          %v1821 = vmul.f32 %v1797, %v1817
          %v1822 = vmul.f32 %v1798, %v1817
          %v1823 = vmul.f32 %v1799, %v1817
          %v1824 = vmul.f32 %v1800, %v1817
          %v1825 = vmul.f32 %v1801, %v1817
          %v1834 = vrot.slane %v1818, 1
          %v1835 = vrot.slane %v1819, 1
          %v1836 = vsel %vm1729, %v1834, %v1835
          %v1837 = vrot.slane %v1820, 1
          %v1838 = vrot.slane %v1821, 1
          %v1839 = vsel %vm1729, %v1837, %v1838
          %v1840 = vrot.slane %v1822, 1
          %v1841 = vrot.slane %v1823, 1
          %v1842 = vsel %vm1729, %v1840, %v1841
          %v1843 = vrot.slane %v1824, 1
          %v1844 = vrot.slane %v1825, 1
          %v1845 = vsel %vm1729, %v1843, %v1844
          %v1850 = vadd.f32 %v1810, %v1836
          %v1851 = vadd.f32 %v1811, %v1839
          %v1852 = vadd.f32 %v1812, %v1842
          %v1853 = vadd.f32 %v1813, %v1845
          %v1854 = vlaneseq
          %v1855 = vshrl.u32 %v1854, 7
          %v1856 = vsub.s32 5, %v1855
          %v1857 = vrot.slane %v387, %v1856
          %v1858 = vmul.f32 %v1794, %v1857
          %v1859 = vmul.f32 %v1795, %v1857
          %v1860 = vmul.f32 %v1796, %v1857
          %v1861 = vmul.f32 %v1797, %v1857
          %v1862 = vmul.f32 %v1798, %v1857
          %v1863 = vmul.f32 %v1799, %v1857
          %v1864 = vmul.f32 %v1800, %v1857
          %v1865 = vmul.f32 %v1801, %v1857
          %v1874 = vrot.slane %v1858, 2
          %v1875 = vrot.slane %v1859, 2
          %v1876 = vsel %vm1770, %v1874, %v1875
          %v1877 = vrot.slane %v1860, 2
          %v1878 = vrot.slane %v1861, 2
          %v1879 = vsel %vm1770, %v1877, %v1878
          %v1880 = vrot.slane %v1862, 2
          %v1881 = vrot.slane %v1863, 2
          %v1882 = vsel %vm1770, %v1880, %v1881
          %v1883 = vrot.slane %v1864, 2
          %v1884 = vrot.slane %v1865, 2
          %v1885 = vsel %vm1770, %v1883, %v1884
          %v1890 = vadd.f32 %v1850, %v1876
          %v1891 = vadd.f32 %v1851, %v1879
          %v1892 = vadd.f32 %v1852, %v1882
          %v1893 = vadd.f32 %v1853, %v1885
          %s1894 = sadd.s32 %s1690, 2
          %s1895 = smul.u32 %s1894, 16
          %s1896 = scalar_lea.vmem [#allocation3], %s1895
          %v1897 = vld [vmem:[%s1896] sm:$0xff]
          %v1898 = vld [vmem:[%s1896 + $0x8] sm:$0x3]
          %v1899 = vld [vmem:[%s1896 + $0x10] sm:$0xff]
          %v1900 = vld [vmem:[%s1896 + $0x18] sm:$0x3]
          %v1901 = vld [vmem:[%s1896 + $0x20] sm:$0xff]
          %v1902 = vld [vmem:[%s1896 + $0x28] sm:$0x3]
          %v1903 = vld [vmem:[%s1896 + $0x30] sm:$0xff]
          %v1904 = vld [vmem:[%s1896 + $0x38] sm:$0x3]
          %v1905 = vlaneseq
          %v1906 = vshrl.u32 %v1905, 7
          %v1907 = vsub.s32 6, %v1906
          %v1908 = vrot.slane %v387, %v1907
          %v1909 = vmul.f32 %v1897, %v1908
          %v1910 = vmul.f32 %v1899, %v1908
          %v1911 = vmul.f32 %v1901, %v1908
          %v1912 = vmul.f32 %v1903, %v1908
          %v1913 = vadd.f32 %v1890, %v1909
          %v1914 = vadd.f32 %v1891, %v1910
          %v1915 = vadd.f32 %v1892, %v1911
          %v1916 = vadd.f32 %v1893, %v1912
          %v1917 = vlaneseq
          %v1918 = vshrl.u32 %v1917, 7
          %v1919 = vsub.s32 7, %v1918
          %v1920 = vrot.slane %v387, %v1919
          %v1921 = vmul.f32 %v1897, %v1920
          %v1922 = vmul.f32 %v1898, %v1920
          %v1923 = vmul.f32 %v1899, %v1920
          %v1924 = vmul.f32 %v1900, %v1920
          %v1925 = vmul.f32 %v1901, %v1920
          %v1926 = vmul.f32 %v1902, %v1920
          %v1927 = vmul.f32 %v1903, %v1920
          %v1928 = vmul.f32 %v1904, %v1920
          %v1937 = vrot.slane %v1921, 1
          %v1938 = vrot.slane %v1922, 1
          %v1939 = vsel %vm1729, %v1937, %v1938
          %v1940 = vrot.slane %v1923, 1
          %v1941 = vrot.slane %v1924, 1
          %v1942 = vsel %vm1729, %v1940, %v1941
          %v1943 = vrot.slane %v1925, 1
          %v1944 = vrot.slane %v1926, 1
          %v1945 = vsel %vm1729, %v1943, %v1944
          %v1946 = vrot.slane %v1927, 1
          %v1947 = vrot.slane %v1928, 1
          %v1948 = vsel %vm1729, %v1946, %v1947
          %v1953 = vadd.f32 %v1913, %v1939
          %v1954 = vadd.f32 %v1914, %v1942
          %v1955 = vadd.f32 %v1915, %v1945
          %v1956 = vadd.f32 %v1916, %v1948
          %v1957 = vlaneseq
          %v1958 = vshrl.u32 %v1957, 7
          %v1959 = vsub.s32 0, %v1958
          %v1960 = vrot.slane %v388, %v1959
          %v1961 = vmul.f32 %v1897, %v1960
          %v1962 = vmul.f32 %v1898, %v1960
          %v1963 = vmul.f32 %v1899, %v1960
          %v1964 = vmul.f32 %v1900, %v1960
          %v1965 = vmul.f32 %v1901, %v1960
          %v1966 = vmul.f32 %v1902, %v1960
          %v1967 = vmul.f32 %v1903, %v1960
          %v1968 = vmul.f32 %v1904, %v1960
          %v1977 = vrot.slane %v1961, 2
          %v1978 = vrot.slane %v1962, 2
          %v1979 = vsel %vm1770, %v1977, %v1978
          %v1980 = vrot.slane %v1963, 2
          %v1981 = vrot.slane %v1964, 2
          %v1982 = vsel %vm1770, %v1980, %v1981
          %v1983 = vrot.slane %v1965, 2
          %v1984 = vrot.slane %v1966, 2
          %v1985 = vsel %vm1770, %v1983, %v1984
          %v1986 = vrot.slane %v1967, 2
          %v1987 = vrot.slane %v1968, 2
          %v1988 = vsel %vm1770, %v1986, %v1987
          %v1993 = vadd.f32 %v1953, %v1979
          %v1994 = vadd.f32 %v1954, %v1982
          %v1995 = vadd.f32 %v1955, %v1985
          %v1996 = vadd.f32 %v1956, %v1988
          %s1997 = scalar_lea.vmem [#allocation4], %s1691
          %v1998 = vld [vmem:[%s1997] sm:$0xff]
          %v1999 = vld [vmem:[%s1997 + $0x8] sm:$0x3]
          %v2000 = vld [vmem:[%s1997 + $0x10] sm:$0xff]
          %v2001 = vld [vmem:[%s1997 + $0x18] sm:$0x3]
          %v2002 = vld [vmem:[%s1997 + $0x20] sm:$0xff]
          %v2003 = vld [vmem:[%s1997 + $0x28] sm:$0x3]
          %v2004 = vld [vmem:[%s1997 + $0x30] sm:$0xff]
          %v2005 = vld [vmem:[%s1997 + $0x38] sm:$0x3]
          %v2006 = vlaneseq
          %v2007 = vshrl.u32 %v2006, 7
          %v2008 = vsub.s32 0, %v2007
          %v2009 = vrot.slane %v389, %v2008
          %v2010 = vmul.f32 %v1998, %v2009
          %v2011 = vmul.f32 %v2000, %v2009
          %v2012 = vmul.f32 %v2002, %v2009
          %v2013 = vmul.f32 %v2004, %v2009
          %v2014 = vadd.f32 %v1993, %v2010
          %v2015 = vadd.f32 %v1994, %v2011
          %v2016 = vadd.f32 %v1995, %v2012
          %v2017 = vadd.f32 %v1996, %v2013
          %v2018 = vlaneseq
          %v2019 = vshrl.u32 %v2018, 7
          %v2020 = vsub.s32 1, %v2019
          %v2021 = vrot.slane %v389, %v2020
          %v2022 = vmul.f32 %v1998, %v2021
          %v2023 = vmul.f32 %v1999, %v2021
          %v2024 = vmul.f32 %v2000, %v2021
          %v2025 = vmul.f32 %v2001, %v2021
          %v2026 = vmul.f32 %v2002, %v2021
          %v2027 = vmul.f32 %v2003, %v2021
          %v2028 = vmul.f32 %v2004, %v2021
          %v2029 = vmul.f32 %v2005, %v2021
          %v2038 = vrot.slane %v2022, 1
          %v2039 = vrot.slane %v2023, 1
          %v2040 = vsel %vm1729, %v2038, %v2039
          %v2041 = vrot.slane %v2024, 1
          %v2042 = vrot.slane %v2025, 1
          %v2043 = vsel %vm1729, %v2041, %v2042
          %v2044 = vrot.slane %v2026, 1
          %v2045 = vrot.slane %v2027, 1
          %v2046 = vsel %vm1729, %v2044, %v2045
          %v2047 = vrot.slane %v2028, 1
          %v2048 = vrot.slane %v2029, 1
          %v2049 = vsel %vm1729, %v2047, %v2048
          %v2054 = vadd.f32 %v2014, %v2040
          %v2055 = vadd.f32 %v2015, %v2043
          %v2056 = vadd.f32 %v2016, %v2046
          %v2057 = vadd.f32 %v2017, %v2049
          %v2058 = vlaneseq
          %v2059 = vshrl.u32 %v2058, 7
          %v2060 = vsub.s32 2, %v2059
          %v2061 = vrot.slane %v389, %v2060
          %v2062 = vmul.f32 %v1998, %v2061
          %v2063 = vmul.f32 %v1999, %v2061
          %v2064 = vmul.f32 %v2000, %v2061
          %v2065 = vmul.f32 %v2001, %v2061
          %v2066 = vmul.f32 %v2002, %v2061
          %v2067 = vmul.f32 %v2003, %v2061
          %v2068 = vmul.f32 %v2004, %v2061
          %v2069 = vmul.f32 %v2005, %v2061
          %v2078 = vrot.slane %v2062, 2
          %v2079 = vrot.slane %v2063, 2
          %v2080 = vsel %vm1770, %v2078, %v2079
          %v2081 = vrot.slane %v2064, 2
          %v2082 = vrot.slane %v2065, 2
          %v2083 = vsel %vm1770, %v2081, %v2082
          %v2084 = vrot.slane %v2066, 2
          %v2085 = vrot.slane %v2067, 2
          %v2086 = vsel %vm1770, %v2084, %v2085
          %v2087 = vrot.slane %v2068, 2
          %v2088 = vrot.slane %v2069, 2
          %v2089 = vsel %vm1770, %v2087, %v2088
          %v2094 = vadd.f32 %v2054, %v2080
          %v2095 = vadd.f32 %v2055, %v2083
          %v2096 = vadd.f32 %v2056, %v2086
          %v2097 = vadd.f32 %v2057, %v2089
          %s2098 = scalar_lea.vmem [#allocation4], %s1792
          %v2099 = vld [vmem:[%s2098] sm:$0xff]
          %v2100 = vld [vmem:[%s2098 + $0x8] sm:$0x3]
          %v2101 = vld [vmem:[%s2098 + $0x10] sm:$0xff]
          %v2102 = vld [vmem:[%s2098 + $0x18] sm:$0x3]
          %v2103 = vld [vmem:[%s2098 + $0x20] sm:$0xff]
          %v2104 = vld [vmem:[%s2098 + $0x28] sm:$0x3]
          %v2105 = vld [vmem:[%s2098 + $0x30] sm:$0xff]
          %v2106 = vld [vmem:[%s2098 + $0x38] sm:$0x3]
          %v2107 = vlaneseq
          %v2108 = vshrl.u32 %v2107, 7
          %v2109 = vsub.s32 3, %v2108
          %v2110 = vrot.slane %v389, %v2109
          %v2111 = vmul.f32 %v2099, %v2110
          %v2112 = vmul.f32 %v2101, %v2110
          %v2113 = vmul.f32 %v2103, %v2110
          %v2114 = vmul.f32 %v2105, %v2110
          %v2115 = vadd.f32 %v2094, %v2111
          %v2116 = vadd.f32 %v2095, %v2112
          %v2117 = vadd.f32 %v2096, %v2113
          %v2118 = vadd.f32 %v2097, %v2114
          %v2119 = vlaneseq
          %v2120 = vshrl.u32 %v2119, 7
          %v2121 = vsub.s32 4, %v2120
          %v2122 = vrot.slane %v389, %v2121
          %v2123 = vmul.f32 %v2099, %v2122
          %v2124 = vmul.f32 %v2100, %v2122
          %v2125 = vmul.f32 %v2101, %v2122
          %v2126 = vmul.f32 %v2102, %v2122
          %v2127 = vmul.f32 %v2103, %v2122
          %v2128 = vmul.f32 %v2104, %v2122
          %v2129 = vmul.f32 %v2105, %v2122
          %v2130 = vmul.f32 %v2106, %v2122
          %v2139 = vrot.slane %v2123, 1
          %v2140 = vrot.slane %v2124, 1
          %v2141 = vsel %vm1729, %v2139, %v2140
          %v2142 = vrot.slane %v2125, 1
          %v2143 = vrot.slane %v2126, 1
          %v2144 = vsel %vm1729, %v2142, %v2143
          %v2145 = vrot.slane %v2127, 1
          %v2146 = vrot.slane %v2128, 1
          %v2147 = vsel %vm1729, %v2145, %v2146
          %v2148 = vrot.slane %v2129, 1
          %v2149 = vrot.slane %v2130, 1
          %v2150 = vsel %vm1729, %v2148, %v2149
          %v2155 = vadd.f32 %v2115, %v2141
          %v2156 = vadd.f32 %v2116, %v2144
          %v2157 = vadd.f32 %v2117, %v2147
          %v2158 = vadd.f32 %v2118, %v2150
          %v2159 = vlaneseq
          %v2160 = vshrl.u32 %v2159, 7
          %v2161 = vsub.s32 5, %v2160
          %v2162 = vrot.slane %v389, %v2161
          %v2163 = vmul.f32 %v2099, %v2162
          %v2164 = vmul.f32 %v2100, %v2162
          %v2165 = vmul.f32 %v2101, %v2162
          %v2166 = vmul.f32 %v2102, %v2162
          %v2167 = vmul.f32 %v2103, %v2162
          %v2168 = vmul.f32 %v2104, %v2162
          %v2169 = vmul.f32 %v2105, %v2162
          %v2170 = vmul.f32 %v2106, %v2162
          %v2179 = vrot.slane %v2163, 2
          %v2180 = vrot.slane %v2164, 2
          %v2181 = vsel %vm1770, %v2179, %v2180
          %v2182 = vrot.slane %v2165, 2
          %v2183 = vrot.slane %v2166, 2
          %v2184 = vsel %vm1770, %v2182, %v2183
          %v2185 = vrot.slane %v2167, 2
          %v2186 = vrot.slane %v2168, 2
          %v2187 = vsel %vm1770, %v2185, %v2186
          %v2188 = vrot.slane %v2169, 2
          %v2189 = vrot.slane %v2170, 2
          %v2190 = vsel %vm1770, %v2188, %v2189
          %v2195 = vadd.f32 %v2155, %v2181
          %v2196 = vadd.f32 %v2156, %v2184
          %v2197 = vadd.f32 %v2157, %v2187
          %v2198 = vadd.f32 %v2158, %v2190
          %s2199 = scalar_lea.vmem [#allocation4], %s1895
          %v2200 = vld [vmem:[%s2199] sm:$0xff]
          %v2201 = vld [vmem:[%s2199 + $0x8] sm:$0x3]
          %v2202 = vld [vmem:[%s2199 + $0x10] sm:$0xff]
          %v2203 = vld [vmem:[%s2199 + $0x18] sm:$0x3]
          %v2204 = vld [vmem:[%s2199 + $0x20] sm:$0xff]
          %v2205 = vld [vmem:[%s2199 + $0x28] sm:$0x3]
          %v2206 = vld [vmem:[%s2199 + $0x30] sm:$0xff]
          %v2207 = vld [vmem:[%s2199 + $0x38] sm:$0x3]
          %v2208 = vlaneseq
          %v2209 = vshrl.u32 %v2208, 7
          %v2210 = vsub.s32 6, %v2209
          %v2211 = vrot.slane %v389, %v2210
          %v2212 = vmul.f32 %v2200, %v2211
          %v2213 = vmul.f32 %v2202, %v2211
          %v2214 = vmul.f32 %v2204, %v2211
          %v2215 = vmul.f32 %v2206, %v2211
          %v2216 = vadd.f32 %v2195, %v2212
          %v2217 = vadd.f32 %v2196, %v2213
          %v2218 = vadd.f32 %v2197, %v2214
          %v2219 = vadd.f32 %v2198, %v2215
          %v2220 = vlaneseq
          %v2221 = vshrl.u32 %v2220, 7
          %v2222 = vsub.s32 7, %v2221
          %v2223 = vrot.slane %v389, %v2222
          %v2224 = vmul.f32 %v2200, %v2223
          %v2225 = vmul.f32 %v2201, %v2223
          %v2226 = vmul.f32 %v2202, %v2223
          %v2227 = vmul.f32 %v2203, %v2223
          %v2228 = vmul.f32 %v2204, %v2223
          %v2229 = vmul.f32 %v2205, %v2223
          %v2230 = vmul.f32 %v2206, %v2223
          %v2231 = vmul.f32 %v2207, %v2223
          %v2240 = vrot.slane %v2224, 1
          %v2241 = vrot.slane %v2225, 1
          %v2242 = vsel %vm1729, %v2240, %v2241
          %v2243 = vrot.slane %v2226, 1
          %v2244 = vrot.slane %v2227, 1
          %v2245 = vsel %vm1729, %v2243, %v2244
          %v2246 = vrot.slane %v2228, 1
          %v2247 = vrot.slane %v2229, 1
          %v2248 = vsel %vm1729, %v2246, %v2247
          %v2249 = vrot.slane %v2230, 1
          %v2250 = vrot.slane %v2231, 1
          %v2251 = vsel %vm1729, %v2249, %v2250
          %v2256 = vadd.f32 %v2216, %v2242
          %v2257 = vadd.f32 %v2217, %v2245
          %v2258 = vadd.f32 %v2218, %v2248
          %v2259 = vadd.f32 %v2219, %v2251
          %v2260 = vlaneseq
          %v2261 = vshrl.u32 %v2260, 7
          %v2262 = vsub.s32 0, %v2261
          %v2263 = vrot.slane %v390, %v2262
          %v2264 = vmul.f32 %v2200, %v2263
          %v2265 = vmul.f32 %v2201, %v2263
          %v2266 = vmul.f32 %v2202, %v2263
          %v2267 = vmul.f32 %v2203, %v2263
          %v2268 = vmul.f32 %v2204, %v2263
          %v2269 = vmul.f32 %v2205, %v2263
          %v2270 = vmul.f32 %v2206, %v2263
          %v2271 = vmul.f32 %v2207, %v2263
          %v2280 = vrot.slane %v2264, 2
          %v2281 = vrot.slane %v2265, 2
          %v2282 = vsel %vm1770, %v2280, %v2281
          %v2283 = vrot.slane %v2266, 2
          %v2284 = vrot.slane %v2267, 2
          %v2285 = vsel %vm1770, %v2283, %v2284
          %v2286 = vrot.slane %v2268, 2
          %v2287 = vrot.slane %v2269, 2
          %v2288 = vsel %vm1770, %v2286, %v2287
          %v2289 = vrot.slane %v2270, 2
          %v2290 = vrot.slane %v2271, 2
          %v2291 = vsel %vm1770, %v2289, %v2290
          %v2296 = vadd.f32 %v2256, %v2282
          %v2297 = vadd.f32 %v2257, %v2285
          %v2298 = vadd.f32 %v2258, %v2288
          %v2299 = vadd.f32 %v2259, %v2291
          %v2301 = vlaneseq
          %v2302 = vshrl.u32 %v2301, 7
          %v2303 = vsub.s32 0, %v2302
          %v2304 = vrot.slane %v1674, %v2303
          %v2306 = vadd.f32 %v2296, %v2304
          %v2307 = vadd.f32 %v2297, %v2304
          %v2308 = vadd.f32 %v2298, %v2304
          %v2309 = vadd.f32 %v2299, %v2304
          %v2310 = vmax.f32 %v2306, 0.0
          %v2311 = vmax.f32 %v2307, 0.0
          %v2312 = vmax.f32 %v2308, 0.0
          %v2313 = vmax.f32 %v2309, 0.0
          %v2315 = vlaneseq
          %v2316 = vshrl.u32 %v2315, 7
          %v2317 = vsub.s32 0, %v2316
          %v2318 = vrot.slane %v1683, %v2317
          %v2321 = vsel %vm321, %v2310, 0
          %v2324 = vsel %vm321, %v2311, 0
          %v2327 = vsel %vm321, %v2312, 0
          %v2330 = vsel %vm321, %v2313, 0
          %2332 = vmatprep.subr.mxu0 0.0
          %2333 = vmatpush1.msra.mxu0 %v1675
          %2334 = vmatprep.subr.mxu0 0.0
          %2335 = vmatpush1.msra.mxu0 %v1676
          %2336 = vmatprep.subr.mxu0 0.0
          %2337 = vmatpush1.msra.mxu0 %v1677
          %2338 = vmatprep.subr.mxu0 0.0
          %2339 = vmatpush1.msra.mxu0 %v1678
          %2340 = vmatprep.subr.mxu0 0.0
          %2341 = vmatpush1.msra.mxu0 %v1679
          %2342 = vmatprep.subr.mxu0 0.0
          %2343 = vmatpush1.msra.mxu0 %v1680
          %2344 = vmatprep.subr.mxu0 0.0
          %2345 = vmatpush1.msra.mxu0 %v1681
          %2346 = vmatprep.subr.mxu0 0.0
          %2347 = vmatpush1.msra.mxu0 %v1682
          %2348 = vmatprep.subr.mxu0 0.0
          %2349 = vmatpush1.msra.mxu0 0.0
          %2350 = vmatprep.subr.mxu0 0.0
          %2351 = vmatpush1.msra.mxu0 0.0
          %2352 = vmatprep.subr.mxu0 0.0
          %2353 = vmatpush1.msra.mxu0 0.0
          %2354 = vmatprep.subr.mxu0 0.0
          %2355 = vmatpush1.msra.mxu0 0.0
          %2356 = vmatprep.subr.mxu0 0.0
          %2357 = vmatpush1.msra.mxu0 0.0
          %2358 = vmatprep.subr.mxu0 0.0
          %2359 = vmatpush1.msra.mxu0 0.0
          %2360 = vmatprep.subr.mxu0 0.0
          %2361 = vmatpush1.msra.mxu0 0.0
          %2362 = vmatprep.subr.mxu0 0.0
          %2363 = vmatpush1.msra.mxu0 0.0
          %2364 = vmatprep.subr.mxu0 0.0
          %2365 = vmatpush1.msra.mxu0 0.0
          %2366 = vmatprep.subr.mxu0 0.0
          %2367 = vmatpush1.msra.mxu0 0.0
          %2368 = vmatprep.subr.mxu0 0.0
          %2369 = vmatpush1.msra.mxu0 0.0
          %2370 = vmatprep.subr.mxu0 0.0
          %2371 = vmatpush1.msra.mxu0 0.0
          %2372 = vmatprep.subr.mxu0 0.0
          %2373 = vmatpush1.msra.mxu0 0.0
          %2374 = vmatprep.subr.mxu0 0.0
          %2375 = vmatpush1.msra.mxu0 0.0
          %2376 = vmatprep.subr.mxu0 0.0
          %2377 = vmatpush1.msra.mxu0 0.0
          %2378 = vmatprep.subr.mxu0 0.0
          %2379 = vmatpush1.msra.mxu0 0.0
          %2380 = vmatprep.subr.mxu0 0.0
          %2381 = vmatpush1.msra.mxu0 0.0
          %2382 = vmatprep.subr.mxu0 0.0
          %2383 = vmatpush1.msra.mxu0 0.0
          %2384 = vmatprep.subr.mxu0 0.0
          %2385 = vmatpush1.msra.mxu0 0.0
          %2386 = vmatprep.subr.mxu0 0.0
          %2387 = vmatpush1.msra.mxu0 0.0
          %2388 = vmatprep.subr.mxu0 0.0
          %2389 = vmatpush1.msra.mxu0 0.0
          %2390 = vmatprep.subr.mxu0 0.0
          %2391 = vmatpush1.msra.mxu0 0.0
          %2392 = vmatprep.subr.mxu0 0.0
          %2393 = vmatpush1.msra.mxu0 0.0
          %2394 = vmatprep.subr.mxu0 0.0
          %2395 = vmatpush1.msra.mxu0 0.0
          %2396 = vmatprep.mubr.f32.mxu0 0.0
          %2397 = vmatmul.mubr.f32.gmra.mrb[0].mxu0 %v2321
          %v2398 = vpop.f32.mrb[0].mxu0
          %v2399 = vadd.f32 %v2318, %v2398
          %v2400 = vpop.f32.mrb[0].mxu0
          %2401 = vmatprep.mubr.f32.mxu0 0.0
          %2402 = vmatmul.mubr.f32.gmra.mrb[0].mxu0 %v2324
          %v2403 = vpop.f32.mrb[0].mxu0
          %v2404 = vadd.f32 %v2318, %v2403
          %v2405 = vpop.f32.mrb[0].mxu0
          %2406 = vmatprep.mubr.f32.mxu0 0.0
          %2407 = vmatmul.mubr.f32.gmra.mrb[0].mxu0 %v2327
          %v2408 = vpop.f32.mrb[0].mxu0
          %v2409 = vadd.f32 %v2318, %v2408
          %v2410 = vpop.f32.mrb[0].mxu0
          %2411 = vmatprep.mubr.f32.mxu0 0.0
          %2412 = vmatmul.mubr.f32.gmra.mrb[0].mxu0 %v2330
          %v2413 = vpop.f32.mrb[0].mxu0
          %v2414 = vadd.f32 %v2318, %v2413
          %v2415 = vpop.f32.mrb[0].mxu0
          %2416 = vdwg.mxu0
          %v2417 = vxor.u32 %v2399, 2147483648
          %v2418 = vxor.u32 %v2404, 2147483648
          %v2419 = vxor.u32 %v2409, 2147483648
          %v2420 = vxor.u32 %v2414, 2147483648
          %v2421 = vmul.f32 %v2417, 1.442695
          %v2422 = vpow.pop %v2421
          %v2423 = vmul.f32 %v2418, 1.442695
          %v2424 = vpow.pop %v2423
          %v2425 = vmul.f32 %v2419, 1.442695
          %v2426 = vpow.pop %v2425
          %v2427 = vmul.f32 %v2420, 1.442695
          %v2428 = vpow.pop %v2427
          %v2429 = vadd.f32 %v2422, 1.0
          %v2430 = vadd.f32 %v2424, 1.0
          %v2431 = vadd.f32 %v2426, 1.0
          %v2432 = vadd.f32 %v2428, 1.0
          %v2433 = vrcp.pop %v2429
          %v2434 = vmul.f32 1.0, %v2433
          %v2435 = vrcp.pop %v2430
          %v2436 = vmul.f32 1.0, %v2435
          %v2437 = vrcp.pop %v2431
          %v2438 = vmul.f32 1.0, %v2437
          %v2439 = vrcp.pop %v2432
          %v2440 = vmul.f32 1.0, %v2439
          %s2441 = smul.u32 %s1690, 8
          %s2442 = scalar_lea.vmem %s298, %s2441 [#allocation5]
          %vm2443 = vcmask 261120
          %2444 = vst.msk [vmem:[%s2442] sm:$0xff] %vm2443, %v2434
          %2445 = vst.msk [vmem:[%s2442 + $0x8] sm:$0xff] %vm2443, %v2436
          %2446 = vst.msk [vmem:[%s2442 + $0x10] sm:$0xff] %vm2443, %v2438
          %2447 = vst.msk [vmem:[%s2442 + $0x18] sm:$0xff] %vm2443, %v2440
        $region64: #{tpu_custom_call.1} parent=51 // loop_footer
          %s1689 = sadd.s32 1, %s1685
        $region65: #{tpu_custom_call.1} parent=51 // loop_footer_branch
          %1684 = sbr.rel target = $region61
        $region66: #{tpu_custom_call.1} parent=51 // loop_exit
          _
        %s2448 = sand.u32 %s203, 1
        %s2449 = scalar_lea.sflag [#allocation6], %s2448
        %s2450 = sand.u32 %s203, 1
        %s2451 = smul.addr %s2450, 64
        %s2452 = scalar_lea.vmem [#allocation5], %s2451
        // Predicated region
        $region67: #{tpu_custom_call.1} parent=51 // pred_check
          %p2453 = pneg %p213
        $region68: #{tpu_custom_call.1} parent=51 // pred_check_branch
          %2455 = sbr.rel (%p2453) target = $region70
        $region69: #{tpu_custom_call.1} parent=51 // pred_region
          %s2457 = ssub.s32 1024, 1024
          %2458 = vsyncadd %s2449, %s2457
          %s2459 = smul.addr %s22, 8
          %s2460 = smul.addr %s2459, 128
          %s2461 = scalar_lea.hbm %s8, %s2460
          %s2462 = sshll.u32 %s2452, 4
          %s2463 = int_to_ptr.vmem [resolvable:$true] %s2462
          %2468 = dma.vmem_to_hbm [thread:$0]  %s2463, 1024, %s2461, %s2449, 128, 128, 8
        $region70: #{tpu_custom_call.1} parent=51 // pred_fallthru
          _
      $region52: #{tpu_custom_call.1} parent=5 // pred_fallthru
        _
      %p2469 = scmp.le.s32.totalorder 2, %s17
      // Predicated region
      $region71: #{tpu_custom_call.1} parent=5 // pred_check
        %p2470 = pneg %p2469
      $region72: #{tpu_custom_call.1} parent=5 // pred_check_branch
        %2472 = sbr.rel (%p2470) target = $region74
      $region73: #{tpu_custom_call.1} parent=5 // pred_region
        %s2473 = ssub.s32 %s17, 2
        // Predicated region
        $region75: #{tpu_custom_call.1} parent=73 // pred_check
          %p2474 = pneg %p219
        $region76: #{tpu_custom_call.1} parent=73 // pred_check_branch
          %2476 = sbr.rel (%p2474) target = $region78
        $region77: #{tpu_custom_call.1} parent=73 // pred_region
          %s2477 = sand.u32 %s204, 1
          %s2478 = scalar_lea.sflag [#allocation6], %s2477
          %s2479 = sand.u32 %s204, 1
          %s2480 = smul.addr %s2479, 64
          %s2481 = scalar_lea.vmem [#allocation5], %s2480
          %2482 = dma.done %s2478, 1024
        $region78: #{tpu_custom_call.1} parent=73 // pred_fallthru
          _
      $region74: #{tpu_custom_call.1} parent=5 // pred_fallthru
        _
    $region6: #{tpu_custom_call.1} parent=1 // loop_footer
      %s21 = sadd.s32 1, %s17
    $region7: #{tpu_custom_call.1} parent=1 // loop_footer_branch
      %16 = sbr.rel target = $region3
    $region8: #{tpu_custom_call.1} parent=1 // loop_exit
      _
    %2483 = vsyncpa [#allocation6], 1
    %s2484 = scalar_lea.sflag [#allocation6], 1
    %2485 = vsyncpa %s2484, 1

</llo_original>
